<compile_context>
chip_gen: v6e
topology: v6e:2x2x1
jax: 0.10.0
libtpu: 0.0.40
codegen_flags: <defaults>
</compile_context>

<pallas_src>
import functools
import math

import jax
import jax.numpy as jnp
from jax.experimental import pallas as pl
from jax.experimental.pallas import tpu as pltpu

# ----------------------------- config (small, synthetic) -----------------------------
VOCAB = 100
MAX_POS = 64
HIDDEN = 32
N_HEADS = 2
HEAD_DIM = HIDDEN // N_HEADS
INTERMEDIATE = 64
N_LAYERS = 2
NUM_LABELS = 3
LN_EPS = 1e-12
LOGIT_PAD = 128          # lane-dense classifier output, sliced to NUM_LABELS in wrapper
MASK_NEG = -1e9          # HF uses dtype-min; equivalent after softmax (f32)

# ----------------------------- weight-slab layout (static row offsets) -----------------------------
# One (TOTAL_ROWS, 128) f32 slab holds every weight/bias used inside the kernel.
WQKV_R = 0                               # (H, 3H)  fused QKV weight
WO_R = HIDDEN                            # (H, H)   attention output weight
W1_R = 2 * HIDDEN                        # (H, I)   FFN intermediate weight
W2_R = 3 * HIDDEN                        # (I, H)   FFN output weight
VEC_R = 3 * HIDDEN + INTERMEDIATE        # 8 rows of per-layer vectors (biases / LN params)
LAYER_ROWS = VEC_R + 8                   # rows per layer (= 168)

HEAD_R = N_LAYERS * LAYER_ROWS           # pooler / classifier / embedding-LN block
WP_R = HEAD_R                            # (H, H) pooler weight
WC_R = HEAD_R + HIDDEN                   # (H, LOGIT_PAD) classifier weight (lane padded)
BP_ROW = HEAD_R + 2 * HIDDEN             # pooler bias row
BC_ROW = BP_ROW + 1                      # classifier bias row (lane padded)
EMB_G_ROW = BP_ROW + 2                   # embedding LayerNorm gamma
EMB_B_ROW = BP_ROW + 3                   # embedding LayerNorm beta
TOTAL_ROWS = ((BP_ROW + 4 + 7) // 8) * 8  # pad to a multiple of 8 sublanes (= 408)


# ----------------------------- in-kernel helpers -----------------------------
def _ln(x, g, b):
    mean = jnp.mean(x, axis=-1, keepdims=True)
    var = jnp.mean((x - mean) ** 2, axis=-1, keepdims=True)
    return (x - mean) * jax.lax.rsqrt(var + LN_EPS) * g + b


# ----------------------------- fully fused BERT forward kernel -----------------------------
def _bert_fused_kernel(word_ref, pos_tok_ref, mask_ref, slab_ref,
                       hidden_ref, logits_ref, *, n_layers, n_heads, head_dim):
    H = HIDDEN
    I = INTERMEDIATE
    QKV = 3 * H
    scale = 1.0 / math.sqrt(head_dim)

    def vec(row, n):                         # (1, n) row-vector from the slab
        return slab_ref[row:row + 1, 0:n]

    # ---- prologue: embedding sum + LayerNorm ----
    emb_g = vec(EMB_G_ROW, H)
    emb_b = vec(EMB_B_ROW, H)
    x = _ln(word_ref[0] + pos_tok_ref[0], emb_g, emb_b)              # (S, H)
    hidden_ref[0, 0] = x

    # additive key-padding mask built in-kernel from the (1, S) mask vector
    madd = jnp.where(mask_ref[0] > 0.5, 0.0, MASK_NEG)               # (1, S)

    # ---- encoder layers (statically unrolled; all weights resident in VMEM) ----
    for l in range(n_layers):
        base = l * LAYER_ROWS
        w_qkv = slab_ref[base + WQKV_R: base + WQKV_R + H, 0:QKV]
        w_o = slab_ref[base + WO_R: base + WO_R + H, 0:H]
        w_1 = slab_ref[base + W1_R: base + W1_R + H, 0:I]
        w_2 = slab_ref[base + W2_R: base + W2_R + I, 0:H]
        b_qkv = vec(base + VEC_R + 0, QKV)
        b_o = vec(base + VEC_R + 1, H)
        ln1g = vec(base + VEC_R + 2, H)
        ln1b = vec(base + VEC_R + 3, H)
        b_1 = vec(base + VEC_R + 4, I)
        b_2 = vec(base + VEC_R + 5, H)
        ln2g = vec(base + VEC_R + 6, H)
        ln2b = vec(base + VEC_R + 7, H)

        # fused QKV projection: one lane-dense (S, H) x (H, 3H) matmul
        qkv = jnp.dot(x, w_qkv, preferred_element_type=jnp.float32) + b_qkv   # (S, 3H)

        ctx_parts = []
        for h in range(n_heads):                                     # static unroll (n_heads=2)
            qh = qkv[:, h * head_dim:(h + 1) * head_dim] * scale
            kh = qkv[:, H + h * head_dim: H + (h + 1) * head_dim]
            vh = qkv[:, 2 * H + h * head_dim: 2 * H + (h + 1) * head_dim]
            # q . k^T without materializing a transpose (contract last dims)
            s = jax.lax.dot_general(qh, kh, (((1,), (1,)), ((), ())),
                                    preferred_element_type=jnp.float32) + madd
            s = s - jnp.max(s, axis=-1, keepdims=True)
            p = jnp.exp(s)
            p = p * pl.reciprocal(jnp.sum(p, axis=-1, keepdims=True), approx=True)
            ctx_parts.append(jnp.dot(p, vh, preferred_element_type=jnp.float32))
        ctx = jnp.concatenate(ctx_parts, axis=-1)                    # (S, NH*D)

        # fused head-output projection
        attn = jnp.dot(ctx, w_o, preferred_element_type=jnp.float32) + b_o
        x = _ln(x + attn, ln1g, ln1b)

        # FFN
        h1 = jnp.dot(x, w_1, preferred_element_type=jnp.float32) + b_1
        h1 = jax.nn.gelu(h1, approximate=True)  # TODO(synk): HF BERT uses exact erf-GELU
        ffn = jnp.dot(h1, w_2, preferred_element_type=jnp.float32) + b_2
        x = _ln(x + ffn, ln2g, ln2b)

        hidden_ref[1 + l, 0] = x

    # ---- epilogue: pooler (tanh on CLS) + classifier (lane-dense logits) ----
    w_p = slab_ref[WP_R:WP_R + H, 0:H]
    w_c = slab_ref[WC_R:WC_R + H, 0:LOGIT_PAD]
    b_p = vec(BP_ROW, H)
    b_c = vec(BC_ROW, LOGIT_PAD)
    cls = x[0:1, :]                                                  # CLS row of last layer
    pooled = jnp.tanh(jnp.dot(cls, w_p, preferred_element_type=jnp.float32) + b_p)
    logits_ref[0] = jnp.dot(pooled, w_c, preferred_element_type=jnp.float32) + b_c


def bert_fused(word, pos_tok, mask_f, slab):
    B, S, H = word.shape
    kernel = functools.partial(_bert_fused_kernel,
                               n_layers=N_LAYERS, n_heads=N_HEADS, head_dim=HEAD_DIM)
    grid_spec = pltpu.PrefetchScalarGridSpec(
        num_scalar_prefetch=0,
        grid=(B,),
        in_specs=[
            pl.BlockSpec((1, S, H), lambda b: (b, 0, 0)),                # gathered word embeds
            pl.BlockSpec((1, S, H), lambda b: (0, 0, 0)),                # pos + token-type embeds
            pl.BlockSpec((1, 1, S), lambda b: (b, 0, 0)),                # key-padding mask (f32)
            pl.BlockSpec((TOTAL_ROWS, 128), lambda b: (0, 0)),           # weight slab (one DMA)
        ],
        out_specs=[
            pl.BlockSpec((N_LAYERS + 1, 1, S, H), lambda b: (0, b, 0, 0)),   # hidden states
            pl.BlockSpec((1, 1, LOGIT_PAD), lambda b: (b, 0, 0)),            # padded logits
        ],
    )
    return pl.pallas_call(
        kernel,
        out_shape=(jax.ShapeDtypeStruct((N_LAYERS + 1, B, S, H), jnp.float32),
                   jax.ShapeDtypeStruct((B, 1, LOGIT_PAD), jnp.float32)),
        grid_spec=grid_spec,
        compiler_params=pltpu.CompilerParams(dimension_semantics=("parallel",)),
    )(word, pos_tok, mask_f, slab)


# ----------------------------- parameter init (deterministic, packed slab) -----------------------------
def init_params(key):
    def dense(k, fan_in, fan_out):
        return (0.02 * jax.random.normal(k, (fan_in, fan_out), jnp.float32),
                jnp.zeros((fan_out,), jnp.float32))

    keys = jax.random.split(key, 4 + N_LAYERS)
    params = {
        "word_emb": 0.02 * jax.random.normal(keys[0], (VOCAB, HIDDEN), jnp.float32),
        "pos_emb": 0.02 * jax.random.normal(keys[1], (MAX_POS, HIDDEN), jnp.float32),
        "tok_emb": 0.02 * jax.random.normal(keys[2], (2, HIDDEN), jnp.float32),
    }

    slab = jnp.zeros((TOTAL_ROWS, 128), jnp.float32)
    ones_h = jnp.ones((HIDDEN,), jnp.float32)
    zeros_h = jnp.zeros((HIDDEN,), jnp.float32)

    for li in range(N_LAYERS):
        lk = jax.random.split(keys[3 + li], 6)
        wq, bq = dense(lk[0], HIDDEN, HIDDEN)
        wk, bk = dense(lk[1], HIDDEN, HIDDEN)
        wv, bv = dense(lk[2], HIDDEN, HIDDEN)
        wo, bo = dense(lk[3], HIDDEN, HIDDEN)
        w1, b1 = dense(lk[4], HIDDEN, INTERMEDIATE)
        w2, b2 = dense(lk[5], INTERMEDIATE, HIDDEN)

        base = li * LAYER_ROWS
        wqkv = jnp.concatenate([wq, wk, wv], axis=1)                 # (H, 3H), per-head cols contiguous
        bqkv = jnp.concatenate([bq, bk, bv], axis=0)                 # (3H,)
        slab = slab.at[base + WQKV_R: base + WQKV_R + HIDDEN, :3 * HIDDEN].set(wqkv)
        slab = slab.at[base + WO_R: base + WO_R + HIDDEN, :HIDDEN].set(wo)
        slab = slab.at[base + W1_R: base + W1_R + HIDDEN, :INTERMEDIATE].set(w1)
        slab = slab.at[base + W2_R: base + W2_R + INTERMEDIATE, :HIDDEN].set(w2)
        v = base + VEC_R
        slab = slab.at[v + 0, :3 * HIDDEN].set(bqkv)
        slab = slab.at[v + 1, :HIDDEN].set(bo)
        slab = slab.at[v + 2, :HIDDEN].set(ones_h)    # ln1 gamma
        slab = slab.at[v + 3, :HIDDEN].set(zeros_h)   # ln1 beta
        slab = slab.at[v + 4, :INTERMEDIATE].set(b1)
        slab = slab.at[v + 5, :HIDDEN].set(b2)
        slab = slab.at[v + 6, :HIDDEN].set(ones_h)    # ln2 gamma
        slab = slab.at[v + 7, :HIDDEN].set(zeros_h)   # ln2 beta

    pk = jax.random.split(keys[-1], 2)
    wp, bp = dense(pk[0], HIDDEN, HIDDEN)
    wc, bc = dense(pk[1], HIDDEN, NUM_LABELS)
    slab = slab.at[WP_R:WP_R + HIDDEN, :HIDDEN].set(wp)
    slab = slab.at[WC_R:WC_R + HIDDEN, :NUM_LABELS].set(wc)         # lane-padded classifier
    slab = slab.at[BP_ROW, :HIDDEN].set(bp)
    slab = slab.at[BC_ROW, :NUM_LABELS].set(bc)
    slab = slab.at[EMB_G_ROW, :HIDDEN].set(ones_h)                  # embedding LN gamma
    slab = slab.at[EMB_B_ROW, :HIDDEN].set(zeros_h)                 # embedding LN beta
    params["slab"] = slab
    return params


# ----------------------------- forward pass -----------------------------
def custom_bert_forward(params, input_ids, attention_mask, labels):
    B, S = input_ids.shape

    # embedding-table gather stays in plain JAX (data-dependent); token_type_ids=None -> type 0
    word = jnp.take(params["word_emb"], input_ids, axis=0)                    # (B, S, H)
    pos_tok = (params["pos_emb"][:S] + params["tok_emb"][0])[None]            # (1, S, H)
    mask_f = attention_mask.astype(jnp.float32).reshape(B, 1, S)              # (B, 1, S)

    hidden_all, logits_pad = bert_fused(word, pos_tok, mask_f, params["slab"])
    # hidden_all: (L+1, B, S, H)   logits_pad: (B, 1, LOGIT_PAD)

    hidden_states = tuple(hidden_all[i] for i in range(N_LAYERS + 1))
    last_hidden_layer = hidden_states[-1]
    representations = last_hidden_layer[:, 0, :]                              # [batch, embedding size]
    logits = logits_pad[:, 0, :NUM_LABELS]

    # cross-entropy loss (mean), as in BertForSequenceClassification with labels
    log_probs = jax.nn.log_softmax(logits, axis=-1)
    loss = -jnp.mean(jnp.take_along_axis(log_probs, labels[:, None], axis=-1))

    outputs = {"loss": loss, "logits": logits, "hidden_states": hidden_states}
    return outputs, representations


# ----------------------------- main -----------------------------
if __name__ == "__main__":
    B, S = 2, 8
    key = jax.random.PRNGKey(0)
    k_ids, k_lab, k_par = jax.random.split(key, 3)

    input_ids = jax.random.randint(k_ids, (B, S), 0, VOCAB, dtype=jnp.int32)
    attention_mask = jnp.ones((B, S), jnp.int32).at[:, S - 2:].set(0)   # pad last 2 tokens
    labels = jax.random.randint(k_lab, (B,), 0, NUM_LABELS, dtype=jnp.int32)

    params = init_params(k_par)

    outputs, representations = jax.jit(custom_bert_forward)(
        params, input_ids, attention_mask, labels)
    jax.block_until_ready(outputs["loss"])
    jax.block_until_ready(outputs["logits"])
    jax.block_until_ready(representations)

    assert outputs["logits"].shape == (B, NUM_LABELS)
    assert representations.shape == (B, HIDDEN)
    assert len(outputs["hidden_states"]) == N_LAYERS + 1
    assert all(h.shape == (B, S, HIDDEN) for h in outputs["hidden_states"])
    assert bool(jnp.isfinite(outputs["loss"]))
    print("KERNEL_OK")
</pallas_src>

<mosaic_0001>
module attributes {stable_mosaic.version = 11 : i64} {
  func.func @_bert_fused_kernel(%arg0: i32, %arg1: memref<1x8x32xf32, #tpu.memory_space<vmem>>, %arg2: memref<1x8x32xf32, #tpu.memory_space<vmem>>, %arg3: memref<1x1x8xf32, #tpu.memory_space<vmem>>, %arg4: memref<408x128xf32, #tpu.memory_space<vmem>>, %arg5: memref<3x1x8x32xf32, #tpu.memory_space<vmem>>, %arg6: memref<1x1x128xf32, #tpu.memory_space<vmem>>) attributes {dimension_semantics = [#tpu.dimension_semantics<parallel>], iteration_bounds = array<i64: 2>, scalar_prefetch = 0 : i64, scratch_operands = 0 : i64, tpu.core_type = #tpu.core_type<tc>, window_params = [{transform_indices = @transform_0, window_bounds = array<i64: 1, 8, 32>}, {pipeline_mode = #tpu.pipeline_mode<synchronous>, transform_indices = @transform_1, window_bounds = array<i64: 1, 8, 32>}, {transform_indices = @transform_2, window_bounds = array<i64: 1, 1, 8>}, {pipeline_mode = #tpu.pipeline_mode<synchronous>, transform_indices = @transform_3, window_bounds = array<i64: 408, 128>}, {transform_indices = @transform_4, window_bounds = array<i64: 3, 1, 8, 32>}, {transform_indices = @transform_5, window_bounds = array<i64: 1, 1, 128>}]} {
    %c402 = arith.constant 402 : index
    %c0 = arith.constant 0 : index
    %0 = vector.load %arg4[%c402, %c0] : memref<408x128xf32, #tpu.memory_space<vmem>>, vector<1x32xf32>
    %c403 = arith.constant 403 : index
    %c0_0 = arith.constant 0 : index
    %1 = vector.load %arg4[%c403, %c0_0] : memref<408x128xf32, #tpu.memory_space<vmem>>, vector<1x32xf32>
    %c0_1 = arith.constant 0 : index
    %c0_2 = arith.constant 0 : index
    %c0_3 = arith.constant 0 : index
    %2 = vector.load %arg1[%c0_1, %c0_2, %c0_3] : memref<1x8x32xf32, #tpu.memory_space<vmem>>, vector<1x8x32xf32>
    %3 = vector.shape_cast %2 : vector<1x8x32xf32> to vector<8x32xf32>
    %c0_4 = arith.constant 0 : index
    %c0_5 = arith.constant 0 : index
    %c0_6 = arith.constant 0 : index
    %4 = vector.load %arg2[%c0_4, %c0_5, %c0_6] : memref<1x8x32xf32, #tpu.memory_space<vmem>>, vector<1x8x32xf32>
    %5 = vector.shape_cast %4 : vector<1x8x32xf32> to vector<8x32xf32>
    %6 = arith.addf %3, %5 : vector<8x32xf32>
    %cst = arith.constant dense<0.000000e+00> : vector<8xf32>
    %7 = vector.multi_reduction <add>, %6, %cst [1] : vector<8x32xf32> to vector<8xf32>
    %8 = vector.shape_cast %7 : vector<8xf32> to vector<8x1xf32>
    %cst_7 = arith.constant 3.200000e+01 : f32
    %9 = vector.broadcast %cst_7 : f32 to vector<8x1xf32>
    %10 = arith.divf %8, %9 : vector<8x1xf32>
    %11 = vector.broadcast %10 : vector<8x1xf32> to vector<8x32xf32>
    %12 = arith.subf %6, %11 : vector<8x32xf32>
    %13 = arith.mulf %12, %12 : vector<8x32xf32>
    %cst_8 = arith.constant dense<0.000000e+00> : vector<8xf32>
    %14 = vector.multi_reduction <add>, %13, %cst_8 [1] : vector<8x32xf32> to vector<8xf32>
    %15 = vector.shape_cast %14 : vector<8xf32> to vector<8x1xf32>
    %cst_9 = arith.constant 3.200000e+01 : f32
    %16 = vector.broadcast %cst_9 : f32 to vector<8x1xf32>
    %17 = arith.divf %15, %16 : vector<8x1xf32>
    %18 = vector.broadcast %10 : vector<8x1xf32> to vector<8x32xf32>
    %19 = arith.subf %6, %18 : vector<8x32xf32>
    %cst_10 = arith.constant 9.99999996E-13 : f32
    %20 = vector.broadcast %cst_10 : f32 to vector<8x1xf32>
    %21 = arith.addf %17, %20 : vector<8x1xf32>
    %22 = math.rsqrt %21 : vector<8x1xf32>
    %23 = vector.broadcast %22 : vector<8x1xf32> to vector<8x32xf32>
    %24 = arith.mulf %19, %23 : vector<8x32xf32>
    %25 = vector.broadcast %0 : vector<1x32xf32> to vector<8x32xf32>
    %26 = arith.mulf %24, %25 : vector<8x32xf32>
    %27 = vector.broadcast %1 : vector<1x32xf32> to vector<8x32xf32>
    %28 = arith.addf %26, %27 : vector<8x32xf32>
    %c0_11 = arith.constant 0 : index
    %c0_12 = arith.constant 0 : index
    %c0_13 = arith.constant 0 : index
    %c0_14 = arith.constant 0 : index
    %29 = vector.load %arg5[%c0_11, %c0_12, %c0_13, %c0_14] : memref<3x1x8x32xf32, #tpu.memory_space<vmem>>, vector<1x1x8x32xf32>
    %30 = vector.shape_cast %29 : vector<1x1x8x32xf32> to vector<8x32xf32>
    %31 = vector.shape_cast %28 : vector<8x32xf32> to vector<1x1x8x32xf32>
    tpu.vector_store %arg5[%c0_11, %c0_12, %c0_13, %c0_14], %31 {strides = array<i32>} : memref<3x1x8x32xf32, #tpu.memory_space<vmem>>, vector<1x1x8x32xf32>,
    %c0_15 = arith.constant 0 : index
    %c0_16 = arith.constant 0 : index
    %c0_17 = arith.constant 0 : index
    %32 = vector.load %arg3[%c0_15, %c0_16, %c0_17] : memref<1x1x8xf32, #tpu.memory_space<vmem>>, vector<1x1x8xf32>
    %33 = vector.shape_cast %32 : vector<1x1x8xf32> to vector<1x8xf32>
    %cst_18 = arith.constant 5.000000e-01 : f32
    %34 = vector.broadcast %cst_18 : f32 to vector<1x8xf32>
    %35 = arith.cmpf ogt, %33, %34 : vector<1x8xf32>
    %cst_19 = arith.constant 0.000000e+00 : f32
    %cst_20 = arith.constant -1.000000e+09 : f32
    %36 = vector.broadcast %cst_19 : f32 to vector<1x8xf32>
    %37 = vector.broadcast %cst_20 : f32 to vector<1x8xf32>
    %38 = arith.select %35, %36, %37 : vector<1x8xi1>, vector<1x8xf32>
    %c0_21 = arith.constant 0 : index
    %c0_22 = arith.constant 0 : index
    %39 = vector.load %arg4[%c0_21, %c0_22] : memref<408x128xf32, #tpu.memory_space<vmem>>, vector<32x96xf32>
    %c32 = arith.constant 32 : index
    %c0_23 = arith.constant 0 : index
    %40 = vector.load %arg4[%c32, %c0_23] : memref<408x128xf32, #tpu.memory_space<vmem>>, vector<32x32xf32>
    %c64 = arith.constant 64 : index
    %c0_24 = arith.constant 0 : index
    %41 = vector.load %arg4[%c64, %c0_24] : memref<408x128xf32, #tpu.memory_space<vmem>>, vector<32x64xf32>
    %c96 = arith.constant 96 : index
    %c0_25 = arith.constant 0 : index
    %42 = vector.load %arg4[%c96, %c0_25] : memref<408x128xf32, #tpu.memory_space<vmem>>, vector<64x32xf32>
    %c160 = arith.constant 160 : index
    %c0_26 = arith.constant 0 : index
    %43 = vector.load %arg4[%c160, %c0_26] : memref<408x128xf32, #tpu.memory_space<vmem>>, vector<1x96xf32>
    %c161 = arith.constant 161 : index
    %c0_27 = arith.constant 0 : index
    %44 = vector.load %arg4[%c161, %c0_27] : memref<408x128xf32, #tpu.memory_space<vmem>>, vector<1x32xf32>
    %c162 = arith.constant 162 : index
    %c0_28 = arith.constant 0 : index
    %45 = vector.load %arg4[%c162, %c0_28] : memref<408x128xf32, #tpu.memory_space<vmem>>, vector<1x32xf32>
    %c163 = arith.constant 163 : index
    %c0_29 = arith.constant 0 : index
    %46 = vector.load %arg4[%c163, %c0_29] : memref<408x128xf32, #tpu.memory_space<vmem>>, vector<1x32xf32>
    %c164 = arith.constant 164 : index
    %c0_30 = arith.constant 0 : index
    %47 = vector.load %arg4[%c164, %c0_30] : memref<408x128xf32, #tpu.memory_space<vmem>>, vector<1x64xf32>
    %c165 = arith.constant 165 : index
    %c0_31 = arith.constant 0 : index
    %48 = vector.load %arg4[%c165, %c0_31] : memref<408x128xf32, #tpu.memory_space<vmem>>, vector<1x32xf32>
    %c166 = arith.constant 166 : index
    %c0_32 = arith.constant 0 : index
    %49 = vector.load %arg4[%c166, %c0_32] : memref<408x128xf32, #tpu.memory_space<vmem>>, vector<1x32xf32>
    %c167 = arith.constant 167 : index
    %c0_33 = arith.constant 0 : index
    %50 = vector.load %arg4[%c167, %c0_33] : memref<408x128xf32, #tpu.memory_space<vmem>>, vector<1x32xf32>
    %cst_34 = arith.constant dense<0.000000e+00> : vector<8x96xf32>
    %51 = tpu.matmul %28, %39, %cst_34 {dimension_numbers = #tpu.dot_dimension_numbers<[1], [0], [0], [1], [0, 0, 1, 1], [], []>} : vector<8x32xf32>, vector<32x96xf32>, vector<8x96xf32> -> vector<8x96xf32>
    %52 = vector.broadcast %43 : vector<1x96xf32> to vector<8x96xf32>
    %53 = arith.addf %51, %52 : vector<8x96xf32>
    %54 = vector.extract_strided_slice %53 {offsets = [0, 0], sizes = [8, 16], strides = [1, 1]} : vector<8x96xf32> to vector<8x16xf32>
    %cst_35 = arith.constant 2.500000e-01 : f32
    %55 = vector.broadcast %cst_35 : f32 to vector<8x16xf32>
    %56 = arith.mulf %54, %55 : vector<8x16xf32>
    %57 = vector.extract_strided_slice %53 {offsets = [0, 32], sizes = [8, 16], strides = [1, 1]} : vector<8x96xf32> to vector<8x16xf32>
    %58 = vector.extract_strided_slice %53 {offsets = [0, 64], sizes = [8, 16], strides = [1, 1]} : vector<8x96xf32> to vector<8x16xf32>
    %cst_36 = arith.constant dense<0.000000e+00> : vector<8x8xf32>
    %59 = tpu.matmul %56, %57, %cst_36 {dimension_numbers = #tpu.dot_dimension_numbers<[1], [1], [0], [0], [0, 0, 1, 0], [], []>} : vector<8x16xf32>, vector<8x16xf32>, vector<8x8xf32> -> vector<8x8xf32>
    %60 = vector.broadcast %38 : vector<1x8xf32> to vector<8x8xf32>
    %61 = arith.addf %59, %60 : vector<8x8xf32>
    %cst_37 = arith.constant dense<0xFF800000> : vector<8xf32>
    %62 = vector.multi_reduction <maximumf>, %61, %cst_37 [1] : vector<8x8xf32> to vector<8xf32>
    %63 = vector.shape_cast %62 : vector<8xf32> to vector<8x1xf32>
    %64 = vector.broadcast %63 : vector<8x1xf32> to vector<8x8xf32>
    %65 = arith.subf %61, %64 : vector<8x8xf32>
    %66 = math.exp %65 : vector<8x8xf32>
    %cst_38 = arith.constant dense<0.000000e+00> : vector<8xf32>
    %67 = vector.multi_reduction <add>, %66, %cst_38 [1] : vector<8x8xf32> to vector<8xf32>
    %68 = vector.shape_cast %67 : vector<8xf32> to vector<8x1xf32>
    %69 = tpu.reciprocal %68 {approx = true} : vector<8x1xf32> -> vector<8x1xf32>
    %70 = vector.broadcast %69 : vector<8x1xf32> to vector<8x8xf32>
    %71 = arith.mulf %66, %70 : vector<8x8xf32>
    %cst_39 = arith.constant dense<0.000000e+00> : vector<8x16xf32>
    %72 = tpu.matmul %71, %58, %cst_39 {dimension_numbers = #tpu.dot_dimension_numbers<[1], [0], [0], [1], [0, 0, 1, 1], [], []>} : vector<8x8xf32>, vector<8x16xf32>, vector<8x16xf32> -> vector<8x16xf32>
    %73 = vector.extract_strided_slice %53 {offsets = [0, 16], sizes = [8, 16], strides = [1, 1]} : vector<8x96xf32> to vector<8x16xf32>
    %cst_40 = arith.constant 2.500000e-01 : f32
    %74 = vector.broadcast %cst_40 : f32 to vector<8x16xf32>
    %75 = arith.mulf %73, %74 : vector<8x16xf32>
    %76 = vector.extract_strided_slice %53 {offsets = [0, 48], sizes = [8, 16], strides = [1, 1]} : vector<8x96xf32> to vector<8x16xf32>
    %77 = vector.extract_strided_slice %53 {offsets = [0, 80], sizes = [8, 16], strides = [1, 1]} : vector<8x96xf32> to vector<8x16xf32>
    %cst_41 = arith.constant dense<0.000000e+00> : vector<8x8xf32>
    %78 = tpu.matmul %75, %76, %cst_41 {dimension_numbers = #tpu.dot_dimension_numbers<[1], [1], [0], [0], [0, 0, 1, 0], [], []>} : vector<8x16xf32>, vector<8x16xf32>, vector<8x8xf32> -> vector<8x8xf32>
    %79 = vector.broadcast %38 : vector<1x8xf32> to vector<8x8xf32>
    %80 = arith.addf %78, %79 : vector<8x8xf32>
    %cst_42 = arith.constant dense<0xFF800000> : vector<8xf32>
    %81 = vector.multi_reduction <maximumf>, %80, %cst_42 [1] : vector<8x8xf32> to vector<8xf32>
    %82 = vector.shape_cast %81 : vector<8xf32> to vector<8x1xf32>
    %83 = vector.broadcast %82 : vector<8x1xf32> to vector<8x8xf32>
    %84 = arith.subf %80, %83 : vector<8x8xf32>
    %85 = math.exp %84 : vector<8x8xf32>
    %cst_43 = arith.constant dense<0.000000e+00> : vector<8xf32>
    %86 = vector.multi_reduction <add>, %85, %cst_43 [1] : vector<8x8xf32> to vector<8xf32>
    %87 = vector.shape_cast %86 : vector<8xf32> to vector<8x1xf32>
    %88 = tpu.reciprocal %87 {approx = true} : vector<8x1xf32> -> vector<8x1xf32>
    %89 = vector.broadcast %88 : vector<8x1xf32> to vector<8x8xf32>
    %90 = arith.mulf %85, %89 : vector<8x8xf32>
    %cst_44 = arith.constant dense<0.000000e+00> : vector<8x16xf32>
    %91 = tpu.matmul %90, %77, %cst_44 {dimension_numbers = #tpu.dot_dimension_numbers<[1], [0], [0], [1], [0, 0, 1, 1], [], []>} : vector<8x8xf32>, vector<8x16xf32>, vector<8x16xf32> -> vector<8x16xf32>
    %92 = tpu.concatenate %72, %91 in 1 : vector<8x16xf32>, vector<8x16xf32> -> vector<8x32xf32>
    %cst_45 = arith.constant dense<0.000000e+00> : vector<8x32xf32>
    %93 = tpu.matmul %92, %40, %cst_45 {dimension_numbers = #tpu.dot_dimension_numbers<[1], [0], [0], [1], [0, 0, 1, 1], [], []>} : vector<8x32xf32>, vector<32x32xf32>, vector<8x32xf32> -> vector<8x32xf32>
    %94 = vector.broadcast %44 : vector<1x32xf32> to vector<8x32xf32>
    %95 = arith.addf %93, %94 : vector<8x32xf32>
    %96 = arith.addf %28, %95 : vector<8x32xf32>
    %cst_46 = arith.constant dense<0.000000e+00> : vector<8xf32>
    %97 = vector.multi_reduction <add>, %96, %cst_46 [1] : vector<8x32xf32> to vector<8xf32>
    %98 = vector.shape_cast %97 : vector<8xf32> to vector<8x1xf32>
    %cst_47 = arith.constant 3.200000e+01 : f32
    %99 = vector.broadcast %cst_47 : f32 to vector<8x1xf32>
    %100 = arith.divf %98, %99 : vector<8x1xf32>
    %101 = vector.broadcast %100 : vector<8x1xf32> to vector<8x32xf32>
    %102 = arith.subf %96, %101 : vector<8x32xf32>
    %103 = arith.mulf %102, %102 : vector<8x32xf32>
    %cst_48 = arith.constant dense<0.000000e+00> : vector<8xf32>
    %104 = vector.multi_reduction <add>, %103, %cst_48 [1] : vector<8x32xf32> to vector<8xf32>
    %105 = vector.shape_cast %104 : vector<8xf32> to vector<8x1xf32>
    %cst_49 = arith.constant 3.200000e+01 : f32
    %106 = vector.broadcast %cst_49 : f32 to vector<8x1xf32>
    %107 = arith.divf %105, %106 : vector<8x1xf32>
    %108 = vector.broadcast %100 : vector<8x1xf32> to vector<8x32xf32>
    %109 = arith.subf %96, %108 : vector<8x32xf32>
    %cst_50 = arith.constant 9.99999996E-13 : f32
    %110 = vector.broadcast %cst_50 : f32 to vector<8x1xf32>
    %111 = arith.addf %107, %110 : vector<8x1xf32>
    %112 = math.rsqrt %111 : vector<8x1xf32>
    %113 = vector.broadcast %112 : vector<8x1xf32> to vector<8x32xf32>
    %114 = arith.mulf %109, %113 : vector<8x32xf32>
    %115 = vector.broadcast %45 : vector<1x32xf32> to vector<8x32xf32>
    %116 = arith.mulf %114, %115 : vector<8x32xf32>
    %117 = vector.broadcast %46 : vector<1x32xf32> to vector<8x32xf32>
    %118 = arith.addf %116, %117 : vector<8x32xf32>
    %cst_51 = arith.constant dense<0.000000e+00> : vector<8x64xf32>
    %119 = tpu.matmul %118, %41, %cst_51 {dimension_numbers = #tpu.dot_dimension_numbers<[1], [0], [0], [1], [0, 0, 1, 1], [], []>} : vector<8x32xf32>, vector<32x64xf32>, vector<8x64xf32> -> vector<8x64xf32>
    %120 = vector.broadcast %47 : vector<1x64xf32> to vector<8x64xf32>
    %121 = arith.addf %119, %120 : vector<8x64xf32>
    %122 = arith.mulf %121, %121 : vector<8x64xf32>
    %123 = arith.mulf %121, %122 : vector<8x64xf32>
    %cst_52 = arith.constant 4.471500e-02 : f32
    %124 = vector.broadcast %cst_52 : f32 to vector<8x64xf32>
    %125 = arith.mulf %124, %123 : vector<8x64xf32>
    %126 = arith.addf %121, %125 : vector<8x64xf32>
    %cst_53 = arith.constant 0.797884583 : f32
    %127 = vector.broadcast %cst_53 : f32 to vector<8x64xf32>
    %128 = arith.mulf %127, %126 : vector<8x64xf32>
    %129 = math.tanh %128 : vector<8x64xf32>
    %cst_54 = arith.constant 1.000000e+00 : f32
    %130 = vector.broadcast %cst_54 : f32 to vector<8x64xf32>
    %131 = arith.addf %130, %129 : vector<8x64xf32>
    %cst_55 = arith.constant 5.000000e-01 : f32
    %132 = vector.broadcast %cst_55 : f32 to vector<8x64xf32>
    %133 = arith.mulf %132, %131 : vector<8x64xf32>
    %134 = arith.mulf %121, %133 : vector<8x64xf32>
    %cst_56 = arith.constant dense<0.000000e+00> : vector<8x32xf32>
    %135 = tpu.matmul %134, %42, %cst_56 {dimension_numbers = #tpu.dot_dimension_numbers<[1], [0], [0], [1], [0, 0, 1, 1], [], []>} : vector<8x64xf32>, vector<64x32xf32>, vector<8x32xf32> -> vector<8x32xf32>
    %136 = vector.broadcast %48 : vector<1x32xf32> to vector<8x32xf32>
    %137 = arith.addf %135, %136 : vector<8x32xf32>
    %138 = arith.addf %118, %137 : vector<8x32xf32>
    %cst_57 = arith.constant dense<0.000000e+00> : vector<8xf32>
    %139 = vector.multi_reduction <add>, %138, %cst_57 [1] : vector<8x32xf32> to vector<8xf32>
    %140 = vector.shape_cast %139 : vector<8xf32> to vector<8x1xf32>
    %cst_58 = arith.constant 3.200000e+01 : f32
    %141 = vector.broadcast %cst_58 : f32 to vector<8x1xf32>
    %142 = arith.divf %140, %141 : vector<8x1xf32>
    %143 = vector.broadcast %142 : vector<8x1xf32> to vector<8x32xf32>
    %144 = arith.subf %138, %143 : vector<8x32xf32>
    %145 = arith.mulf %144, %144 : vector<8x32xf32>
    %cst_59 = arith.constant dense<0.000000e+00> : vector<8xf32>
    %146 = vector.multi_reduction <add>, %145, %cst_59 [1] : vector<8x32xf32> to vector<8xf32>
    %147 = vector.shape_cast %146 : vector<8xf32> to vector<8x1xf32>
    %cst_60 = arith.constant 3.200000e+01 : f32
    %148 = vector.broadcast %cst_60 : f32 to vector<8x1xf32>
    %149 = arith.divf %147, %148 : vector<8x1xf32>
    %150 = vector.broadcast %142 : vector<8x1xf32> to vector<8x32xf32>
    %151 = arith.subf %138, %150 : vector<8x32xf32>
    %cst_61 = arith.constant 9.99999996E-13 : f32
    %152 = vector.broadcast %cst_61 : f32 to vector<8x1xf32>
    %153 = arith.addf %149, %152 : vector<8x1xf32>
    %154 = math.rsqrt %153 : vector<8x1xf32>
    %155 = vector.broadcast %154 : vector<8x1xf32> to vector<8x32xf32>
    %156 = arith.mulf %151, %155 : vector<8x32xf32>
    %157 = vector.broadcast %49 : vector<1x32xf32> to vector<8x32xf32>
    %158 = arith.mulf %156, %157 : vector<8x32xf32>
    %159 = vector.broadcast %50 : vector<1x32xf32> to vector<8x32xf32>
    %160 = arith.addf %158, %159 : vector<8x32xf32>
    %c1 = arith.constant 1 : index
    %c0_62 = arith.constant 0 : index
    %c0_63 = arith.constant 0 : index
    %c0_64 = arith.constant 0 : index
    %161 = vector.load %arg5[%c1, %c0_62, %c0_63, %c0_64] : memref<3x1x8x32xf32, #tpu.memory_space<vmem>>, vector<1x1x8x32xf32>
    %162 = vector.shape_cast %161 : vector<1x1x8x32xf32> to vector<8x32xf32>
    %163 = vector.shape_cast %160 : vector<8x32xf32> to vector<1x1x8x32xf32>
    tpu.vector_store %arg5[%c1, %c0_62, %c0_63, %c0_64], %163 {strides = array<i32>} : memref<3x1x8x32xf32, #tpu.memory_space<vmem>>, vector<1x1x8x32xf32>,
    %c168 = arith.constant 168 : index
    %c0_65 = arith.constant 0 : index
    %164 = vector.load %arg4[%c168, %c0_65] : memref<408x128xf32, #tpu.memory_space<vmem>>, vector<32x96xf32>
    %c200 = arith.constant 200 : index
    %c0_66 = arith.constant 0 : index
    %165 = vector.load %arg4[%c200, %c0_66] : memref<408x128xf32, #tpu.memory_space<vmem>>, vector<32x32xf32>
    %c232 = arith.constant 232 : index
    %c0_67 = arith.constant 0 : index
    %166 = vector.load %arg4[%c232, %c0_67] : memref<408x128xf32, #tpu.memory_space<vmem>>, vector<32x64xf32>
    %c264 = arith.constant 264 : index
    %c0_68 = arith.constant 0 : index
    %167 = vector.load %arg4[%c264, %c0_68] : memref<408x128xf32, #tpu.memory_space<vmem>>, vector<64x32xf32>
    %c328 = arith.constant 328 : index
    %c0_69 = arith.constant 0 : index
    %168 = vector.load %arg4[%c328, %c0_69] : memref<408x128xf32, #tpu.memory_space<vmem>>, vector<1x96xf32>
    %c329 = arith.constant 329 : index
    %c0_70 = arith.constant 0 : index
    %169 = vector.load %arg4[%c329, %c0_70] : memref<408x128xf32, #tpu.memory_space<vmem>>, vector<1x32xf32>
    %c330 = arith.constant 330 : index
    %c0_71 = arith.constant 0 : index
    %170 = vector.load %arg4[%c330, %c0_71] : memref<408x128xf32, #tpu.memory_space<vmem>>, vector<1x32xf32>
    %c331 = arith.constant 331 : index
    %c0_72 = arith.constant 0 : index
    %171 = vector.load %arg4[%c331, %c0_72] : memref<408x128xf32, #tpu.memory_space<vmem>>, vector<1x32xf32>
    %c332 = arith.constant 332 : index
    %c0_73 = arith.constant 0 : index
    %172 = vector.load %arg4[%c332, %c0_73] : memref<408x128xf32, #tpu.memory_space<vmem>>, vector<1x64xf32>
    %c333 = arith.constant 333 : index
    %c0_74 = arith.constant 0 : index
    %173 = vector.load %arg4[%c333, %c0_74] : memref<408x128xf32, #tpu.memory_space<vmem>>, vector<1x32xf32>
    %c334 = arith.constant 334 : index
    %c0_75 = arith.constant 0 : index
    %174 = vector.load %arg4[%c334, %c0_75] : memref<408x128xf32, #tpu.memory_space<vmem>>, vector<1x32xf32>
    %c335 = arith.constant 335 : index
    %c0_76 = arith.constant 0 : index
    %175 = vector.load %arg4[%c335, %c0_76] : memref<408x128xf32, #tpu.memory_space<vmem>>, vector<1x32xf32>
    %cst_77 = arith.constant dense<0.000000e+00> : vector<8x96xf32>
    %176 = tpu.matmul %160, %164, %cst_77 {dimension_numbers = #tpu.dot_dimension_numbers<[1], [0], [0], [1], [0, 0, 1, 1], [], []>} : vector<8x32xf32>, vector<32x96xf32>, vector<8x96xf32> -> vector<8x96xf32>
    %177 = vector.broadcast %168 : vector<1x96xf32> to vector<8x96xf32>
    %178 = arith.addf %176, %177 : vector<8x96xf32>
    %179 = vector.extract_strided_slice %178 {offsets = [0, 0], sizes = [8, 16], strides = [1, 1]} : vector<8x96xf32> to vector<8x16xf32>
    %cst_78 = arith.constant 2.500000e-01 : f32
    %180 = vector.broadcast %cst_78 : f32 to vector<8x16xf32>
    %181 = arith.mulf %179, %180 : vector<8x16xf32>
    %182 = vector.extract_strided_slice %178 {offsets = [0, 32], sizes = [8, 16], strides = [1, 1]} : vector<8x96xf32> to vector<8x16xf32>
    %183 = vector.extract_strided_slice %178 {offsets = [0, 64], sizes = [8, 16], strides = [1, 1]} : vector<8x96xf32> to vector<8x16xf32>
    %cst_79 = arith.constant dense<0.000000e+00> : vector<8x8xf32>
    %184 = tpu.matmul %181, %182, %cst_79 {dimension_numbers = #tpu.dot_dimension_numbers<[1], [1], [0], [0], [0, 0, 1, 0], [], []>} : vector<8x16xf32>, vector<8x16xf32>, vector<8x8xf32> -> vector<8x8xf32>
    %185 = vector.broadcast %38 : vector<1x8xf32> to vector<8x8xf32>
    %186 = arith.addf %184, %185 : vector<8x8xf32>
    %cst_80 = arith.constant dense<0xFF800000> : vector<8xf32>
    %187 = vector.multi_reduction <maximumf>, %186, %cst_80 [1] : vector<8x8xf32> to vector<8xf32>
    %188 = vector.shape_cast %187 : vector<8xf32> to vector<8x1xf32>
    %189 = vector.broadcast %188 : vector<8x1xf32> to vector<8x8xf32>
    %190 = arith.subf %186, %189 : vector<8x8xf32>
    %191 = math.exp %190 : vector<8x8xf32>
    %cst_81 = arith.constant dense<0.000000e+00> : vector<8xf32>
    %192 = vector.multi_reduction <add>, %191, %cst_81 [1] : vector<8x8xf32> to vector<8xf32>
    %193 = vector.shape_cast %192 : vector<8xf32> to vector<8x1xf32>
    %194 = tpu.reciprocal %193 {approx = true} : vector<8x1xf32> -> vector<8x1xf32>
    %195 = vector.broadcast %194 : vector<8x1xf32> to vector<8x8xf32>
    %196 = arith.mulf %191, %195 : vector<8x8xf32>
    %cst_82 = arith.constant dense<0.000000e+00> : vector<8x16xf32>
    %197 = tpu.matmul %196, %183, %cst_82 {dimension_numbers = #tpu.dot_dimension_numbers<[1], [0], [0], [1], [0, 0, 1, 1], [], []>} : vector<8x8xf32>, vector<8x16xf32>, vector<8x16xf32> -> vector<8x16xf32>
    %198 = vector.extract_strided_slice %178 {offsets = [0, 16], sizes = [8, 16], strides = [1, 1]} : vector<8x96xf32> to vector<8x16xf32>
    %cst_83 = arith.constant 2.500000e-01 : f32
    %199 = vector.broadcast %cst_83 : f32 to vector<8x16xf32>
    %200 = arith.mulf %198, %199 : vector<8x16xf32>
    %201 = vector.extract_strided_slice %178 {offsets = [0, 48], sizes = [8, 16], strides = [1, 1]} : vector<8x96xf32> to vector<8x16xf32>
    %202 = vector.extract_strided_slice %178 {offsets = [0, 80], sizes = [8, 16], strides = [1, 1]} : vector<8x96xf32> to vector<8x16xf32>
    %cst_84 = arith.constant dense<0.000000e+00> : vector<8x8xf32>
    %203 = tpu.matmul %200, %201, %cst_84 {dimension_numbers = #tpu.dot_dimension_numbers<[1], [1], [0], [0], [0, 0, 1, 0], [], []>} : vector<8x16xf32>, vector<8x16xf32>, vector<8x8xf32> -> vector<8x8xf32>
    %204 = vector.broadcast %38 : vector<1x8xf32> to vector<8x8xf32>
    %205 = arith.addf %203, %204 : vector<8x8xf32>
    %cst_85 = arith.constant dense<0xFF800000> : vector<8xf32>
    %206 = vector.multi_reduction <maximumf>, %205, %cst_85 [1] : vector<8x8xf32> to vector<8xf32>
    %207 = vector.shape_cast %206 : vector<8xf32> to vector<8x1xf32>
    %208 = vector.broadcast %207 : vector<8x1xf32> to vector<8x8xf32>
    %209 = arith.subf %205, %208 : vector<8x8xf32>
    %210 = math.exp %209 : vector<8x8xf32>
    %cst_86 = arith.constant dense<0.000000e+00> : vector<8xf32>
    %211 = vector.multi_reduction <add>, %210, %cst_86 [1] : vector<8x8xf32> to vector<8xf32>
    %212 = vector.shape_cast %211 : vector<8xf32> to vector<8x1xf32>
    %213 = tpu.reciprocal %212 {approx = true} : vector<8x1xf32> -> vector<8x1xf32>
    %214 = vector.broadcast %213 : vector<8x1xf32> to vector<8x8xf32>
    %215 = arith.mulf %210, %214 : vector<8x8xf32>
    %cst_87 = arith.constant dense<0.000000e+00> : vector<8x16xf32>
    %216 = tpu.matmul %215, %202, %cst_87 {dimension_numbers = #tpu.dot_dimension_numbers<[1], [0], [0], [1], [0, 0, 1, 1], [], []>} : vector<8x8xf32>, vector<8x16xf32>, vector<8x16xf32> -> vector<8x16xf32>
    %217 = tpu.concatenate %197, %216 in 1 : vector<8x16xf32>, vector<8x16xf32> -> vector<8x32xf32>
    %cst_88 = arith.constant dense<0.000000e+00> : vector<8x32xf32>
    %218 = tpu.matmul %217, %165, %cst_88 {dimension_numbers = #tpu.dot_dimension_numbers<[1], [0], [0], [1], [0, 0, 1, 1], [], []>} : vector<8x32xf32>, vector<32x32xf32>, vector<8x32xf32> -> vector<8x32xf32>
    %219 = vector.broadcast %169 : vector<1x32xf32> to vector<8x32xf32>
    %220 = arith.addf %218, %219 : vector<8x32xf32>
    %221 = arith.addf %160, %220 : vector<8x32xf32>
    %cst_89 = arith.constant dense<0.000000e+00> : vector<8xf32>
    %222 = vector.multi_reduction <add>, %221, %cst_89 [1] : vector<8x32xf32> to vector<8xf32>
    %223 = vector.shape_cast %222 : vector<8xf32> to vector<8x1xf32>
    %cst_90 = arith.constant 3.200000e+01 : f32
    %224 = vector.broadcast %cst_90 : f32 to vector<8x1xf32>
    %225 = arith.divf %223, %224 : vector<8x1xf32>
    %226 = vector.broadcast %225 : vector<8x1xf32> to vector<8x32xf32>
    %227 = arith.subf %221, %226 : vector<8x32xf32>
    %228 = arith.mulf %227, %227 : vector<8x32xf32>
    %cst_91 = arith.constant dense<0.000000e+00> : vector<8xf32>
    %229 = vector.multi_reduction <add>, %228, %cst_91 [1] : vector<8x32xf32> to vector<8xf32>
    %230 = vector.shape_cast %229 : vector<8xf32> to vector<8x1xf32>
    %cst_92 = arith.constant 3.200000e+01 : f32
    %231 = vector.broadcast %cst_92 : f32 to vector<8x1xf32>
    %232 = arith.divf %230, %231 : vector<8x1xf32>
    %233 = vector.broadcast %225 : vector<8x1xf32> to vector<8x32xf32>
    %234 = arith.subf %221, %233 : vector<8x32xf32>
    %cst_93 = arith.constant 9.99999996E-13 : f32
    %235 = vector.broadcast %cst_93 : f32 to vector<8x1xf32>
    %236 = arith.addf %232, %235 : vector<8x1xf32>
    %237 = math.rsqrt %236 : vector<8x1xf32>
    %238 = vector.broadcast %237 : vector<8x1xf32> to vector<8x32xf32>
    %239 = arith.mulf %234, %238 : vector<8x32xf32>
    %240 = vector.broadcast %170 : vector<1x32xf32> to vector<8x32xf32>
    %241 = arith.mulf %239, %240 : vector<8x32xf32>
    %242 = vector.broadcast %171 : vector<1x32xf32> to vector<8x32xf32>
    %243 = arith.addf %241, %242 : vector<8x32xf32>
    %cst_94 = arith.constant dense<0.000000e+00> : vector<8x64xf32>
    %244 = tpu.matmul %243, %166, %cst_94 {dimension_numbers = #tpu.dot_dimension_numbers<[1], [0], [0], [1], [0, 0, 1, 1], [], []>} : vector<8x32xf32>, vector<32x64xf32>, vector<8x64xf32> -> vector<8x64xf32>
    %245 = vector.broadcast %172 : vector<1x64xf32> to vector<8x64xf32>
    %246 = arith.addf %244, %245 : vector<8x64xf32>
    %247 = arith.mulf %246, %246 : vector<8x64xf32>
    %248 = arith.mulf %246, %247 : vector<8x64xf32>
    %cst_95 = arith.constant 4.471500e-02 : f32
    %249 = vector.broadcast %cst_95 : f32 to vector<8x64xf32>
    %250 = arith.mulf %249, %248 : vector<8x64xf32>
    %251 = arith.addf %246, %250 : vector<8x64xf32>
    %cst_96 = arith.constant 0.797884583 : f32
    %252 = vector.broadcast %cst_96 : f32 to vector<8x64xf32>
    %253 = arith.mulf %252, %251 : vector<8x64xf32>
    %254 = math.tanh %253 : vector<8x64xf32>
    %cst_97 = arith.constant 1.000000e+00 : f32
    %255 = vector.broadcast %cst_97 : f32 to vector<8x64xf32>
    %256 = arith.addf %255, %254 : vector<8x64xf32>
    %cst_98 = arith.constant 5.000000e-01 : f32
    %257 = vector.broadcast %cst_98 : f32 to vector<8x64xf32>
    %258 = arith.mulf %257, %256 : vector<8x64xf32>
    %259 = arith.mulf %246, %258 : vector<8x64xf32>
    %cst_99 = arith.constant dense<0.000000e+00> : vector<8x32xf32>
    %260 = tpu.matmul %259, %167, %cst_99 {dimension_numbers = #tpu.dot_dimension_numbers<[1], [0], [0], [1], [0, 0, 1, 1], [], []>} : vector<8x64xf32>, vector<64x32xf32>, vector<8x32xf32> -> vector<8x32xf32>
    %261 = vector.broadcast %173 : vector<1x32xf32> to vector<8x32xf32>
    %262 = arith.addf %260, %261 : vector<8x32xf32>
    %263 = arith.addf %243, %262 : vector<8x32xf32>
    %cst_100 = arith.constant dense<0.000000e+00> : vector<8xf32>
    %264 = vector.multi_reduction <add>, %263, %cst_100 [1] : vector<8x32xf32> to vector<8xf32>
    %265 = vector.shape_cast %264 : vector<8xf32> to vector<8x1xf32>
    %cst_101 = arith.constant 3.200000e+01 : f32
    %266 = vector.broadcast %cst_101 : f32 to vector<8x1xf32>
    %267 = arith.divf %265, %266 : vector<8x1xf32>
    %268 = vector.broadcast %267 : vector<8x1xf32> to vector<8x32xf32>
    %269 = arith.subf %263, %268 : vector<8x32xf32>
    %270 = arith.mulf %269, %269 : vector<8x32xf32>
    %cst_102 = arith.constant dense<0.000000e+00> : vector<8xf32>
    %271 = vector.multi_reduction <add>, %270, %cst_102 [1] : vector<8x32xf32> to vector<8xf32>
    %272 = vector.shape_cast %271 : vector<8xf32> to vector<8x1xf32>
    %cst_103 = arith.constant 3.200000e+01 : f32
    %273 = vector.broadcast %cst_103 : f32 to vector<8x1xf32>
    %274 = arith.divf %272, %273 : vector<8x1xf32>
    %275 = vector.broadcast %267 : vector<8x1xf32> to vector<8x32xf32>
    %276 = arith.subf %263, %275 : vector<8x32xf32>
    %cst_104 = arith.constant 9.99999996E-13 : f32
    %277 = vector.broadcast %cst_104 : f32 to vector<8x1xf32>
    %278 = arith.addf %274, %277 : vector<8x1xf32>
    %279 = math.rsqrt %278 : vector<8x1xf32>
    %280 = vector.broadcast %279 : vector<8x1xf32> to vector<8x32xf32>
    %281 = arith.mulf %276, %280 : vector<8x32xf32>
    %282 = vector.broadcast %174 : vector<1x32xf32> to vector<8x32xf32>
    %283 = arith.mulf %281, %282 : vector<8x32xf32>
    %284 = vector.broadcast %175 : vector<1x32xf32> to vector<8x32xf32>
    %285 = arith.addf %283, %284 : vector<8x32xf32>
    %c2 = arith.constant 2 : index
    %c0_105 = arith.constant 0 : index
    %c0_106 = arith.constant 0 : index
    %c0_107 = arith.constant 0 : index
    %286 = vector.load %arg5[%c2, %c0_105, %c0_106, %c0_107] : memref<3x1x8x32xf32, #tpu.memory_space<vmem>>, vector<1x1x8x32xf32>
    %287 = vector.shape_cast %286 : vector<1x1x8x32xf32> to vector<8x32xf32>
    %288 = vector.shape_cast %285 : vector<8x32xf32> to vector<1x1x8x32xf32>
    tpu.vector_store %arg5[%c2, %c0_105, %c0_106, %c0_107], %288 {strides = array<i32>} : memref<3x1x8x32xf32, #tpu.memory_space<vmem>>, vector<1x1x8x32xf32>,
    %c336 = arith.constant 336 : index
    %c0_108 = arith.constant 0 : index
    %289 = vector.load %arg4[%c336, %c0_108] : memref<408x128xf32, #tpu.memory_space<vmem>>, vector<32x32xf32>
    %c368 = arith.constant 368 : index
    %c0_109 = arith.constant 0 : index
    %290 = vector.load %arg4[%c368, %c0_109] : memref<408x128xf32, #tpu.memory_space<vmem>>, vector<32x128xf32>
    %c400 = arith.constant 400 : index
    %c0_110 = arith.constant 0 : index
    %291 = vector.load %arg4[%c400, %c0_110] : memref<408x128xf32, #tpu.memory_space<vmem>>, vector<1x32xf32>
    %c401 = arith.constant 401 : index
    %c0_111 = arith.constant 0 : index
    %292 = vector.load %arg4[%c401, %c0_111] : memref<408x128xf32, #tpu.memory_space<vmem>>, vector<1x128xf32>
    %293 = vector.extract_strided_slice %285 {offsets = [0, 0], sizes = [1, 32], strides = [1, 1]} : vector<8x32xf32> to vector<1x32xf32>
    %cst_112 = arith.constant dense<0.000000e+00> : vector<1x32xf32>
    %294 = tpu.matmul %293, %289, %cst_112 {dimension_numbers = #tpu.dot_dimension_numbers<[1], [0], [0], [1], [0, 0, 1, 1], [], []>} : vector<1x32xf32>, vector<32x32xf32>, vector<1x32xf32> -> vector<1x32xf32>
    %295 = arith.addf %294, %291 : vector<1x32xf32>
    %296 = math.tanh %295 : vector<1x32xf32>
    %cst_113 = arith.constant dense<0.000000e+00> : vector<1x128xf32>
    %297 = tpu.matmul %296, %290, %cst_113 {dimension_numbers = #tpu.dot_dimension_numbers<[1], [0], [0], [1], [0, 0, 1, 1], [], []>} : vector<1x32xf32>, vector<32x128xf32>, vector<1x128xf32> -> vector<1x128xf32>
    %298 = arith.addf %297, %292 : vector<1x128xf32>
    %c0_114 = arith.constant 0 : index
    %c0_115 = arith.constant 0 : index
    %c0_116 = arith.constant 0 : index
    %299 = vector.load %arg6[%c0_114, %c0_115, %c0_116] : memref<1x1x128xf32, #tpu.memory_space<vmem>>, vector<1x1x128xf32>
    %300 = vector.shape_cast %299 : vector<1x1x128xf32> to vector<1x128xf32>
    %301 = vector.shape_cast %298 : vector<1x128xf32> to vector<1x1x128xf32>
    tpu.vector_store %arg6[%c0_114, %c0_115, %c0_116], %301 {strides = array<i32>} : memref<1x1x128xf32, #tpu.memory_space<vmem>>, vector<1x1x128xf32>,
    return
  }
  func.func @transform_0(%arg0: i32) -> (i32, i32, i32) {
    %c0_i32 = arith.constant 0 : i32
    %c0_i32_0 = arith.constant 0 : i32
    %c0_i32_1 = arith.constant 0 : i32
    return %arg0, %c0_i32, %c0_i32_0 : i32, i32, i32
  }
  func.func @transform_1(%arg0: i32) -> (i32, i32, i32) {
    %c0_i32 = arith.constant 0 : i32
    %c0_i32_0 = arith.constant 0 : i32
    %c0_i32_1 = arith.constant 0 : i32
    %c0_i32_2 = arith.constant 0 : i32
    return %c0_i32, %c0_i32_0, %c0_i32_1 : i32, i32, i32
  }
  func.func @transform_2(%arg0: i32) -> (i32, i32, i32) {
    %c0_i32 = arith.constant 0 : i32
    %c0_i32_0 = arith.constant 0 : i32
    %c0_i32_1 = arith.constant 0 : i32
    return %arg0, %c0_i32, %c0_i32_0 : i32, i32, i32
  }
  func.func @transform_3(%arg0: i32) -> (i32, i32) {
    %c0_i32 = arith.constant 0 : i32
    %c0_i32_0 = arith.constant 0 : i32
    %c0_i32_1 = arith.constant 0 : i32
    return %c0_i32, %c0_i32_0 : i32, i32
  }
  func.func @transform_4(%arg0: i32) -> (i32, i32, i32, i32) {
    %c0_i32 = arith.constant 0 : i32
    %c0_i32_0 = arith.constant 0 : i32
    %c0_i32_1 = arith.constant 0 : i32
    %c0_i32_2 = arith.constant 0 : i32
    return %c0_i32, %arg0, %c0_i32_0, %c0_i32_1 : i32, i32, i32, i32
  }
  func.func @transform_5(%arg0: i32) -> (i32, i32, i32) {
    %c0_i32 = arith.constant 0 : i32
    %c0_i32_0 = arith.constant 0 : i32
    %c0_i32_1 = arith.constant 0 : i32
    return %arg0, %c0_i32, %c0_i32_0 : i32, i32, i32
  }
}

</mosaic_0001>

<llo_original>
// kernel: custom_bert_forward.1
$region0: #{custom_bert_forward.1}
  #allocation0 [shape = 'u32[]', space=smem, size = 0x4, offset = 0x4, fixed_abs, tag = 'smem constant byte address 0x4 - core index']
  #allocation1 [shape = 'u32[144,128]{1,0:T(1,128)}', space=vmem, size = 0x12000, scoped, tag = 'internal scratch']
  %s0 = inlined_call_operand.vmem [shape: f32[2,8,32], index: 0, kind: input, shape index: {}]
  %s1 = inlined_call_operand.vmem [shape: f32[1,8,32], index: 1, kind: input, shape index: {}]
  %s2 = inlined_call_operand.vmem [shape: f32[2,1,8], index: 2, kind: input, shape index: {}]
  %s3 = inlined_call_operand.hbm [shape: f32[408,128], index: 3, kind: input, shape index: {}]
  %s4 = inlined_call_operand.vmem [shape: f32[3,2,8,32], index: 4, kind: output, shape index: {0}]
  %s5 = inlined_call_operand.vmem [shape: f32[2,1,128], index: 5, kind: output, shape index: {1}]
  %6 = xla_tuple %s4, %s5
  %s7 = sld [smem:[#allocation0]]
  $region95: #{custom_bert_forward.1} parent=0
    _
  %s9 = ssub.s32 1, %s7
  %s10 = scalar_select 0, %s9, %s7
  $region1: #{custom_bert_forward.1} parent=0
    #allocation2 [shape = 'u8[208896]{0}', space=vmem, size = 0x33000, scoped, tag = 'input window, operand 3, single buffered']
    #allocation3 [shape = 's32[2]{0}', space=sflag, size = 0x8, scoped, tag = 'scoped memory for custom_bert_forward.1']
    #allocation4 [shape = 'u8[24576]{0}', space=vmem, size = 0x6000, scoped, tag = 'output window, operand 0']
    %11 = vsyncpa [#allocation3], 0
    loop: start=0, step=1, limit=4
    $region2: #{custom_bert_forward.1} parent=1 // loop_pre_header
      _
    $region3: #{custom_bert_forward.1} parent=1 // loop_header
      %s13 = sphi 0, %s17
      %p14 = scmp.ge.s32.totalorder %s13, 4
      %s23 = sphi 0, %s25
      %s26 = sphi 0, %s23
      %s27 = sphi 0, %s26
      %s43 = sphi 0, %s27
      %s47 = sphi 0, %s47
      %s49 = sphi 0, %s47
      %s50 = sphi 0, %s49
      %s64 = sphi 0, %s50
      %s70 = sphi 0, %s72
      %s73 = sphi 0, %s70
      %s74 = sphi 0, %s73
      %s90 = sphi 0, %s74
      %s94 = sphi 0, %s94
      %s96 = sphi 0, %s94
      %s97 = sphi 0, %s96
      %s111 = sphi 0, %s97
      %s117 = sphi 0, %s119
      %s120 = sphi 0, %s117
      %s121 = sphi 0, %s120
      %s137 = sphi 0, %s121
      %s143 = sphi 0, %s145
      %s146 = sphi 0, %s143
      %s147 = sphi 0, %s146
      %s163 = sphi 0, %s147
    $region4: #{custom_bert_forward.1} parent=1 // loop_header_branch
      %16 = sbr.rel (%p14) target = $region8
    $region5: #{custom_bert_forward.1} parent=1 // loop_body
      %s18 = ssub.s32 %s13, 1
      %s19 = ssub.s32 %s13, 2
      %s20 = sadd.s32 %s13, 1
      %s21 = ssub.s32 %s13, %s20
      %p22 = scmp.eq.s32.totalorder %s21, 0
      %s24 = sadd.s32 %s23, 1
      %s25 = scalar_select %p22, %s23, %s24
      %p28 = pneg %p22
      %p29 = scmp.eq.s32.totalorder %s13, 1
      %p30 = por %p28, %p29
      %p31 = scmp.ne.s32.totalorder %s23, %s26
      %p32 = scmp.eq.s32.totalorder %s13, 0
      %p33 = por %p31, %p32
      %p34 = scmp.ne.s32.totalorder %s23, %s26
      %p35 = scmp.eq.s32.totalorder %s18, 1
      %p36 = por %p34, %p35
      %p37 = scmp.ne.s32.totalorder %s26, %s27
      %p38 = scmp.eq.s32.totalorder %s18, 0
      %p39 = por %p37, %p38
      %p40 = scmp.ne.s32.totalorder %s26, %s27
      %p41 = scmp.eq.s32.totalorder %s19, 1
      %p42 = por %p40, %p41
      %p44 = scmp.ne.s32.totalorder %s27, %s43
      %p45 = scmp.eq.s32.totalorder %s19, 0
      %p46 = por %p44, %p45
      %s48 = sadd.s32 %s47, 1
      %p51 = scmp.eq.s32.totalorder %s13, 1
      %p52 = scmp.ne.s32.totalorder %s47, %s49
      %p53 = scmp.eq.s32.totalorder %s13, 0
      %p54 = por %p52, %p53
      %p55 = scmp.ne.s32.totalorder %s47, %s49
      %p56 = scmp.eq.s32.totalorder %s18, 1
      %p57 = por %p55, %p56
      %p58 = scmp.ne.s32.totalorder %s49, %s50
      %p59 = scmp.eq.s32.totalorder %s18, 0
      %p60 = por %p58, %p59
      %p61 = scmp.ne.s32.totalorder %s49, %s50
      %p62 = scmp.eq.s32.totalorder %s19, 1
      %p63 = por %p61, %p62
      %p65 = scmp.ne.s32.totalorder %s50, %s64
      %p66 = scmp.eq.s32.totalorder %s19, 0
      %p67 = por %p65, %p66
      %s68 = ssub.s32 %s13, %s20
      %p69 = scmp.eq.s32.totalorder %s68, 0
      %s71 = sadd.s32 %s70, 1
      %s72 = scalar_select %p69, %s70, %s71
      %p75 = pneg %p69
      %p76 = scmp.eq.s32.totalorder %s13, 1
      %p77 = por %p75, %p76
      %p78 = scmp.ne.s32.totalorder %s70, %s73
      %p79 = scmp.eq.s32.totalorder %s13, 0
      %p80 = por %p78, %p79
      %p81 = scmp.ne.s32.totalorder %s70, %s73
      %p82 = scmp.eq.s32.totalorder %s18, 1
      %p83 = por %p81, %p82
      %p84 = scmp.ne.s32.totalorder %s73, %s74
      %p85 = scmp.eq.s32.totalorder %s18, 0
      %p86 = por %p84, %p85
      %p87 = scmp.ne.s32.totalorder %s73, %s74
      %p88 = scmp.eq.s32.totalorder %s19, 1
      %p89 = por %p87, %p88
      %p91 = scmp.ne.s32.totalorder %s74, %s90
      %p92 = scmp.eq.s32.totalorder %s19, 0
      %p93 = por %p91, %p92
      %s95 = sadd.s32 %s94, 1
      %p98 = scmp.eq.s32.totalorder %s13, 1
      %p99 = scmp.ne.s32.totalorder %s94, %s96
      %p100 = scmp.eq.s32.totalorder %s13, 0
      %p101 = por %p99, %p100
      %p102 = scmp.ne.s32.totalorder %s94, %s96
      %p103 = scmp.eq.s32.totalorder %s18, 1
      %p104 = por %p102, %p103
      %p105 = scmp.ne.s32.totalorder %s96, %s97
      %p106 = scmp.eq.s32.totalorder %s18, 0
      %p107 = por %p105, %p106
      %p108 = scmp.ne.s32.totalorder %s96, %s97
      %p109 = scmp.eq.s32.totalorder %s19, 1
      %p110 = por %p108, %p109
      %p112 = scmp.ne.s32.totalorder %s97, %s111
      %p113 = scmp.eq.s32.totalorder %s19, 0
      %p114 = por %p112, %p113
      %s115 = ssub.s32 %s13, %s20
      %p116 = scmp.eq.s32.totalorder %s115, 0
      %s118 = sadd.s32 %s117, 1
      %s119 = scalar_select %p116, %s117, %s118
      %p122 = pneg %p116
      %p123 = scmp.eq.s32.totalorder %s13, 1
      %p124 = por %p122, %p123
      %p125 = scmp.ne.s32.totalorder %s117, %s120
      %p126 = scmp.eq.s32.totalorder %s13, 0
      %p127 = por %p125, %p126
      %p128 = scmp.ne.s32.totalorder %s117, %s120
      %p129 = scmp.eq.s32.totalorder %s18, 1
      %p130 = por %p128, %p129
      %p131 = scmp.ne.s32.totalorder %s120, %s121
      %p132 = scmp.eq.s32.totalorder %s18, 0
      %p133 = por %p131, %p132
      %p134 = scmp.ne.s32.totalorder %s120, %s121
      %p135 = scmp.eq.s32.totalorder %s19, 1
      %p136 = por %p134, %p135
      %p138 = scmp.ne.s32.totalorder %s121, %s137
      %p139 = scmp.eq.s32.totalorder %s19, 0
      %p140 = por %p138, %p139
      %s141 = ssub.s32 %s13, %s20
      %p142 = scmp.eq.s32.totalorder %s141, 0
      %s144 = sadd.s32 %s143, 1
      %s145 = scalar_select %p142, %s143, %s144
      %p148 = pneg %p142
      %p149 = scmp.eq.s32.totalorder %s13, 1
      %p150 = por %p148, %p149
      %p151 = scmp.ne.s32.totalorder %s143, %s146
      %p152 = scmp.eq.s32.totalorder %s13, 0
      %p153 = por %p151, %p152
      %p154 = scmp.ne.s32.totalorder %s143, %s146
      %p155 = scmp.eq.s32.totalorder %s18, 1
      %p156 = por %p154, %p155
      %p157 = scmp.ne.s32.totalorder %s146, %s147
      %p158 = scmp.eq.s32.totalorder %s18, 0
      %p159 = por %p157, %p158
      %p160 = scmp.ne.s32.totalorder %s146, %s147
      %p161 = scmp.eq.s32.totalorder %s19, 1
      %p162 = por %p160, %p161
      %p164 = scmp.ne.s32.totalorder %s147, %s163
      %p165 = scmp.eq.s32.totalorder %s19, 0
      %p166 = por %p164, %p165
      %p167 = scmp.le.s32.totalorder 1, %s13
      %p168 = scmp.lt.s32.totalorder %s13, 3
      %p169 = pnand %p167, %p168
      %p170 = pneg %p169
      // Predicated region
      $region9: #{custom_bert_forward.1} parent=5 // pred_check
        _
      $region10: #{custom_bert_forward.1} parent=5 // pred_check_branch
        %172 = sbr.rel (%p169) target = $region12
      $region11: #{custom_bert_forward.1} parent=5 // pred_region
        %s173 = ssub.s32 %s13, 1
        // Predicated region
        $region13: #{custom_bert_forward.1} parent=11 // pred_check
          %p174 = pneg %p60
        $region14: #{custom_bert_forward.1} parent=11 // pred_check_branch
          %176 = sbr.rel (%p174) target = $region16
        $region15: #{custom_bert_forward.1} parent=11 // pred_region
          _
        $region16: #{custom_bert_forward.1} parent=11 // pred_fallthru
          _
        // Predicated region
        $region17: #{custom_bert_forward.1} parent=11 // pred_check
          %p177 = pneg %p107
        $region18: #{custom_bert_forward.1} parent=11 // pred_check_branch
          %179 = sbr.rel (%p177) target = $region20
        $region19: #{custom_bert_forward.1} parent=11 // pred_region
          %s181 = ssub.s32 6528, 6528
          %182 = vsyncadd [#allocation3], %s181
          %s183 = sshll.u32 [#allocation2], 4
          %s184 = int_to_ptr.vmem [resolvable:$true] %s183
          %189 = dma.hbm_to_vmem [thread:$0]  %s3, 6528, %s184, [#allocation3], 128, 128, 8
        $region20: #{custom_bert_forward.1} parent=11 // pred_fallthru
          _
      $region12: #{custom_bert_forward.1} parent=5 // pred_fallthru
        _
      %p190 = scmp.lt.s32.totalorder %s13, 2
      // Predicated region
      $region21: #{custom_bert_forward.1} parent=5 // pred_check
        %p191 = pneg %p190
      $region22: #{custom_bert_forward.1} parent=5 // pred_check_branch
        %193 = sbr.rel (%p191) target = $region24
      $region23: #{custom_bert_forward.1} parent=5 // pred_region
        // Predicated region
        $region25: #{custom_bert_forward.1} parent=23 // pred_check
          %p194 = pneg %p33
        $region26: #{custom_bert_forward.1} parent=23 // pred_check_branch
          %196 = sbr.rel (%p194) target = $region28
        $region27: #{custom_bert_forward.1} parent=23 // pred_region
          %p197 = scmp.lt.s32.totalorder %s13, 1
          %s198 = scalar_select %p197, %s13, 1
          %s199 = smul.addr %s198, 8
          %s200 = scalar_lea.vmem %s0, %s199
        $region28: #{custom_bert_forward.1} parent=23 // pred_fallthru
          _
        // Predicated region
        $region29: #{custom_bert_forward.1} parent=23 // pred_check
          %p201 = pneg %p80
        $region30: #{custom_bert_forward.1} parent=23 // pred_check_branch
          %203 = sbr.rel (%p201) target = $region32
        $region31: #{custom_bert_forward.1} parent=23 // pred_region
          %p204 = scmp.lt.s32.totalorder %s13, 1
          %s205 = scalar_select %p204, %s13, 1
          %s206 = scalar_lea.vmem %s2, %s205
        $region32: #{custom_bert_forward.1} parent=23 // pred_fallthru
          _
      $region24: #{custom_bert_forward.1} parent=5 // pred_fallthru
        _
      %p207 = scmp.le.s32.totalorder 1, %s13
      %p208 = scmp.lt.s32.totalorder %s13, 3
      %p209 = pnand %p207, %p208
      %p210 = pneg %p209
      // Predicated region
      $region33: #{custom_bert_forward.1} parent=5 // pred_check
        _
      $region34: #{custom_bert_forward.1} parent=5 // pred_check_branch
        %212 = sbr.rel (%p209) target = $region36
      $region35: #{custom_bert_forward.1} parent=5 // pred_region
        %s213 = ssub.s32 %s13, 1
        // Predicated region
        $region37: #{custom_bert_forward.1} parent=35 // pred_check
          %p214 = pneg %p107
        $region38: #{custom_bert_forward.1} parent=35 // pred_check_branch
          %216 = sbr.rel (%p214) target = $region40
        $region39: #{custom_bert_forward.1} parent=35 // pred_region
          %217 = dma.done [#allocation3], 6528
        $region40: #{custom_bert_forward.1} parent=35 // pred_fallthru
          _
        %p218 = scmp.lt.s32.totalorder %s18, 1
        %s219 = scalar_select %p218, %s18, 1
        %s220 = smul.addr %s219, 8
        %s221 = scalar_lea.vmem %s0, %s220
        %p222 = pneg %p39
        %p223 = pneg %p36
        %p224 = pneg %p60
        %p225 = pneg %p57
        %p226 = scmp.lt.s32.totalorder %s18, 1
        %s227 = scalar_select %p226, %s18, 1
        %s228 = scalar_lea.vmem %s2, %s227
        %p229 = pneg %p86
        %p230 = pneg %p83
        %p231 = pneg %p107
        %p232 = pneg %p104
        %p233 = pneg %p133
        %p234 = pneg %p130
        %s235 = sand.u32 %s120, 1
        %s236 = sand.u32 %s120, 1
        %s237 = smul.addr %s236, 24
        %s238 = scalar_lea.vmem [#allocation4], %s237
        %p239 = pneg %p159
        %p240 = pneg %p156
        %p241 = scmp.lt.s32.totalorder %s18, 1
        %s242 = scalar_select %p241, %s18, 1
        %s243 = scalar_lea.vmem %s5, %s242
        %p244 = scmp.lt.s32.totalorder %s18, 1
        %s245 = scalar_select %p244, %s18, 1
        %s246 = smul.addr %s245, 8
        %s247 = scalar_lea.vmem %s0, %s246
        %p248 = scmp.lt.s32.totalorder %s18, 1
        %s249 = scalar_select %p248, %s18, 1
        %s250 = scalar_lea.vmem %s2, %s249
        %p251 = scmp.lt.s32.totalorder %s18, 1
        %s252 = scalar_select %p251, %s18, 1
        %s253 = scalar_lea.vmem %s5, %s252
        %v254 = vld [vmem:[#allocation2 + $0x192] sm:$0x1]
        %v255 = vld [vmem:[#allocation2 + $0x193] sm:$0x1]
        %v256 = vld [vmem:[%s247] sm:$0xff]
        %v257 = vld [vmem:[%s1] sm:$0xff]
        %v258 = vadd.f32 %v256, %v257
        %vm259 = vcmask 261120
        %v260 = vsel %vm259, %v258, 0.0
        %261 = vadd.xlane.f32.xlu0 %v260
        %v262 = vpop.xlane.xlu0 %261
        %v263 = vrcp.pop 32.0
        %v264 = vmul.f32 %v262, %v263
        %v265 = vsub.f32 %v258, %v264
        %v266 = vmul.f32 %v265, %v265
        %v267 = vsel %vm259, %v266, 0.0
        %268 = vadd.xlane.f32.xlu0 %v267
        %v269 = vpop.xlane.xlu0 %268
        %v270 = vmul.f32 %v269, %v263
        %v271 = vadd.f32 %v270, 1e-12
        %v272 = vrsqrt.pop %v271
        %v273 = vmul.f32 %v265, %v272
        %v274 = vlaneseq
        %v275 = vshrl.u32 %v274, 7
        %v276 = vsub.s32 0, %v275
        %v277 = vrot.slane %v254, %v276
        %v278 = vmul.f32 %v273, %v277
        %v279 = vlaneseq
        %v280 = vshrl.u32 %v279, 7
        %v281 = vsub.s32 0, %v280
        %v282 = vrot.slane %v255, %v281
        %v283 = vadd.f32 %v278, %v282
        %284 = vst.msk [vmem:[%s238] sm:$0xff] %vm259, %v283
        %v285 = vld [vmem:[%s250] sm:$0x1]
        %vm286 = vcmp.gt.f32.partialorder %v285, 0.5
        %v287 = vsel %vm286, 0.0, -1e+09
        %v288 = vld [vmem:[#allocation2] sm:$0xff]
        %v289 = vld [vmem:[#allocation2 + $0x8] sm:$0xff]
        %v290 = vld [vmem:[#allocation2 + $0x10] sm:$0xff]
        %v291 = vld [vmem:[#allocation2 + $0x18] sm:$0xff]
        %v292 = vld [vmem:[#allocation2 + $0x20] sm:$0xff]
        %v293 = vld [vmem:[#allocation2 + $0x28] sm:$0xff]
        %v294 = vld [vmem:[#allocation2 + $0x30] sm:$0xff]
        %v295 = vld [vmem:[#allocation2 + $0x38] sm:$0xff]
        %v296 = vld [vmem:[#allocation2 + $0x40] sm:$0xff]
        %v297 = vld [vmem:[#allocation2 + $0x48] sm:$0xff]
        %v298 = vld [vmem:[#allocation2 + $0x50] sm:$0xff]
        %v299 = vld [vmem:[#allocation2 + $0x58] sm:$0xff]
        %v300 = vld [vmem:[#allocation2 + $0x60] sm:$0xff]
        %v301 = vld [vmem:[#allocation2 + $0x68] sm:$0xff]
        %v302 = vld [vmem:[#allocation2 + $0x70] sm:$0xff]
        %v303 = vld [vmem:[#allocation2 + $0x78] sm:$0xff]
        %v304 = vld [vmem:[#allocation2 + $0x80] sm:$0xff]
        %v305 = vld [vmem:[#allocation2 + $0x88] sm:$0xff]
        %v306 = vld [vmem:[#allocation2 + $0x90] sm:$0xff]
        %v307 = vld [vmem:[#allocation2 + $0x98] sm:$0xff]
        %v308 = vld [vmem:[#allocation2 + $0xa0] sm:$0x1]
        %v309 = vld [vmem:[#allocation2 + $0xa1] sm:$0x1]
        %v310 = vld [vmem:[#allocation2 + $0xa2] sm:$0x1]
        %v311 = vld [vmem:[#allocation2 + $0xa3] sm:$0x1]
        %v312 = vld [vmem:[#allocation2 + $0xa4] sm:$0x1]
        %v313 = vld [vmem:[#allocation2 + $0xa5] sm:$0x1]
        %v314 = vld [vmem:[#allocation2 + $0xa6] sm:$0x1]
        %v315 = vld [vmem:[#allocation2 + $0xa7] sm:$0x1]
        %v316 = vlaneseq
        %v317 = vshrl.u32 %v316, 7
        %v318 = vsub.s32 0, %v317
        %v319 = vrot.slane %v308, %v318
        %v321 = vsel %vm259, %v283, 0
        %323 = vmatprep.subr.mxu0 0.0
        %324 = vmatpush1.msra.mxu0 0.0
        %325 = vmatprep.subr.mxu0 0.0
        %326 = vmatpush1.msra.mxu0 0.0
        %327 = vmatprep.subr.mxu0 0.0
        %328 = vmatpush1.msra.mxu0 0.0
        %329 = vmatprep.subr.mxu0 0.0
        %330 = vmatpush1.msra.mxu0 0.0
        %331 = vmatprep.subr.mxu0 0.0
        %332 = vmatpush1.msra.mxu0 0.0
        %333 = vmatprep.subr.mxu0 0.0
        %334 = vmatpush1.msra.mxu0 0.0
        %335 = vmatprep.subr.mxu0 0.0
        %336 = vmatpush1.msra.mxu0 0.0
        %337 = vmatprep.subr.mxu0 0.0
        %338 = vmatpush1.msra.mxu0 0.0
        %339 = vmatprep.subr.mxu0 0.0
        %340 = vmatpush1.msra.mxu0 0.0
        %341 = vmatprep.subr.mxu0 0.0
        %342 = vmatpush1.msra.mxu0 0.0
        %343 = vmatprep.subr.mxu0 0.0
        %344 = vmatpush1.msra.mxu0 0.0
        %345 = vmatprep.subr.mxu0 0.0
        %346 = vmatpush1.msra.mxu0 0.0
        %347 = vmatprep.subr.mxu0 0.0
        %348 = vmatpush1.msra.mxu0 %v291
        %349 = vmatprep.subr.mxu0 0.0
        %350 = vmatpush1.msra.mxu0 %v290
        %351 = vmatprep.subr.mxu0 0.0
        %352 = vmatpush1.msra.mxu0 %v289
        %353 = vmatprep.subr.mxu0 0.0
        %354 = vmatpush1.msra.mxu0 %v288
        %355 = vmatprep.subr.mxu0 0.0
        %356 = vmatpush2.msra.mxu0 0.0
        %357 = vmatprep.subr.mxu0 0.0
        %358 = vmatpush2.msra.mxu0 0.0
        %359 = vmatprep.subr.mxu0 0.0
        %360 = vmatpush2.msra.mxu0 0.0
        %361 = vmatprep.subr.mxu0 0.0
        %362 = vmatpush2.msra.mxu0 0.0
        %363 = vmatprep.subr.mxu0 0.0
        %364 = vmatpush2.msra.mxu0 0.0
        %365 = vmatprep.subr.mxu0 0.0
        %366 = vmatpush2.msra.mxu0 0.0
        %367 = vmatprep.subr.mxu0 0.0
        %368 = vmatpush2.msra.mxu0 0.0
        %369 = vmatprep.subr.mxu0 0.0
        %370 = vmatpush2.msra.mxu0 0.0
        %371 = vmatprep.subr.mxu0 0.0
        %372 = vmatpush2.msra.mxu0 0.0
        %373 = vmatprep.subr.mxu0 0.0
        %374 = vmatpush2.msra.mxu0 0.0
        %375 = vmatprep.subr.mxu0 0.0
        %376 = vmatpush2.msra.mxu0 0.0
        %377 = vmatprep.subr.mxu0 0.0
        %378 = vmatpush2.msra.mxu0 0.0
        %379 = vmatprep.subr.mxu0 0.0
        %380 = vmatpush2.msra.mxu0 0.0
        %381 = vmatprep.subr.mxu0 0.0
        %382 = vmatpush2.msra.mxu0 0.0
        %383 = vmatprep.subr.mxu0 0.0
        %384 = vmatpush2.msra.mxu0 0.0
        %385 = vmatprep.subr.mxu0 0.0
        %386 = vmatpush2.msra.mxu0 0.0
        %387 = vmatprep.mubr.f32.mxu0 0.0
        %388 = vmatmul.mubr.f32.gmra.mxu0 %v321
        %v389 = vpop.f32.mrf.mxu0
        %v390 = vadd.f32 %v319, %v389
        %v391 = vpop.f32.mrf.mxu0
        %392 = vdwg.mxu0
        %v393 = vmul.f32 %v390, 0.25
        %v395 = vlaneseq
        %v396 = vshrl.u32 %v395, 7
        %v397 = vsub.s32 0, %v396
        %v398 = vrot.slane %v287, %v397
        %401 = vrot.lane.b32.xlu0 %v390, 96
        %v402 = vpop.permute.xlu0 %401
        %vm403 = vcmask 130048
        %v405 = vsel %vm403, %v393, 0
        %v407 = vsel %vm403, %v402, 0
        %409 = vmatprep.subr.mxu0 0.0
        %410 = vmatpush1.xpose.msra.mxu0 0.0
        %411 = vmatprep.subr.mxu0 0.0
        %412 = vmatpush1.xpose.msra.mxu0 0.0
        %413 = vmatprep.subr.mxu0 0.0
        %414 = vmatpush1.xpose.msra.mxu0 0.0
        %415 = vmatprep.subr.mxu0 0.0
        %416 = vmatpush1.xpose.msra.mxu0 0.0
        %417 = vmatprep.subr.mxu0 0.0
        %418 = vmatpush1.xpose.msra.mxu0 0.0
        %419 = vmatprep.subr.mxu0 0.0
        %420 = vmatpush1.xpose.msra.mxu0 0.0
        %421 = vmatprep.subr.mxu0 0.0
        %422 = vmatpush1.xpose.msra.mxu0 0.0
        %423 = vmatprep.subr.mxu0 0.0
        %424 = vmatpush1.xpose.msra.mxu0 0.0
        %425 = vmatprep.subr.mxu0 0.0
        %426 = vmatpush1.xpose.msra.mxu0 0.0
        %427 = vmatprep.subr.mxu0 0.0
        %428 = vmatpush1.xpose.msra.mxu0 0.0
        %429 = vmatprep.subr.mxu0 0.0
        %430 = vmatpush1.xpose.msra.mxu0 0.0
        %431 = vmatprep.subr.mxu0 0.0
        %432 = vmatpush1.xpose.msra.mxu0 0.0
        %433 = vmatprep.subr.mxu0 0.0
        %434 = vmatpush1.xpose.msra.mxu0 0.0
        %435 = vmatprep.subr.mxu0 0.0
        %436 = vmatpush1.xpose.msra.mxu0 0.0
        %437 = vmatprep.subr.mxu0 0.0
        %438 = vmatpush1.xpose.msra.mxu0 0.0
        %439 = vmatprep.subr.mxu0 0.0
        %440 = vmatpush1.xpose.msra.mxu0 %v407
        %441 = vmatprep.subr.mxu0 0.0
        %442 = vmatpush2.xpose.msra.mxu0 0.0
        %443 = vmatprep.subr.mxu0 0.0
        %444 = vmatpush2.xpose.msra.mxu0 0.0
        %445 = vmatprep.subr.mxu0 0.0
        %446 = vmatpush2.xpose.msra.mxu0 0.0
        %447 = vmatprep.subr.mxu0 0.0
        %448 = vmatpush2.xpose.msra.mxu0 0.0
        %449 = vmatprep.subr.mxu0 0.0
        %450 = vmatpush2.xpose.msra.mxu0 0.0
        %451 = vmatprep.subr.mxu0 0.0
        %452 = vmatpush2.xpose.msra.mxu0 0.0
        %453 = vmatprep.subr.mxu0 0.0
        %454 = vmatpush2.xpose.msra.mxu0 0.0
        %455 = vmatprep.subr.mxu0 0.0
        %456 = vmatpush2.xpose.msra.mxu0 0.0
        %457 = vmatprep.subr.mxu0 0.0
        %458 = vmatpush2.xpose.msra.mxu0 0.0
        %459 = vmatprep.subr.mxu0 0.0
        %460 = vmatpush2.xpose.msra.mxu0 0.0
        %461 = vmatprep.subr.mxu0 0.0
        %462 = vmatpush2.xpose.msra.mxu0 0.0
        %463 = vmatprep.subr.mxu0 0.0
        %464 = vmatpush2.xpose.msra.mxu0 0.0
        %465 = vmatprep.subr.mxu0 0.0
        %466 = vmatpush2.xpose.msra.mxu0 0.0
        %467 = vmatprep.subr.mxu0 0.0
        %468 = vmatpush2.xpose.msra.mxu0 0.0
        %469 = vmatprep.subr.mxu0 0.0
        %470 = vmatpush2.xpose.msra.mxu0 0.0
        %471 = vmatprep.subr.mxu0 0.0
        %472 = vmatpush2.xpose.msra.mxu0 0.0
        %473 = vmatprep.mubr.f32.mxu0 0.0
        %474 = vmatmul.mubr.f32.gmra.mxu0 %v405
        %v475 = vpop.f32.mrf.mxu0
        %v476 = vadd.f32 %v398, %v475
        %v477 = vpop.f32.mrf.mxu0
        %478 = vdwg.mxu0
        %vm479 = vcmask 64512
        %v480 = vsel %vm479, %v476, -inf
        %481 = vmax.xlane.f32.xlu0 %v480
        %v482 = vpop.xlane.xlu0 %481
        %v483 = vsub.f32 %v476, %v482
        %v484 = vmul.f32 %v483, 1.442695
        %v485 = vpow.pop %v484
        %v486 = vsel %vm479, %v485, 0.0
        %487 = vadd.xlane.f32.xlu0 %v486
        %v488 = vpop.xlane.xlu0 %487
        %v489 = vrcp.pop %v488
        %v490 = vmul.f32 %v485, %v489
        %491 = vrot.lane.b32.xlu0 %v390, 64
        %v492 = vpop.permute.xlu0 %491
        %v495 = vsel %vm479, %v490, 0
        %497 = vmatprep.subr.mxu0 0.0
        %498 = vmatpush1.msra.mxu0 0.0
        %499 = vmatprep.subr.mxu0 0.0
        %500 = vmatpush1.msra.mxu0 0.0
        %501 = vmatprep.subr.mxu0 0.0
        %502 = vmatpush1.msra.mxu0 0.0
        %503 = vmatprep.subr.mxu0 0.0
        %504 = vmatpush1.msra.mxu0 0.0
        %505 = vmatprep.subr.mxu0 0.0
        %506 = vmatpush1.msra.mxu0 0.0
        %507 = vmatprep.subr.mxu0 0.0
        %508 = vmatpush1.msra.mxu0 0.0
        %509 = vmatprep.subr.mxu0 0.0
        %510 = vmatpush1.msra.mxu0 0.0
        %511 = vmatprep.subr.mxu0 0.0
        %512 = vmatpush1.msra.mxu0 0.0
        %513 = vmatprep.subr.mxu0 0.0
        %514 = vmatpush1.msra.mxu0 0.0
        %515 = vmatprep.subr.mxu0 0.0
        %516 = vmatpush1.msra.mxu0 0.0
        %517 = vmatprep.subr.mxu0 0.0
        %518 = vmatpush1.msra.mxu0 0.0
        %519 = vmatprep.subr.mxu0 0.0
        %520 = vmatpush1.msra.mxu0 0.0
        %521 = vmatprep.subr.mxu0 0.0
        %522 = vmatpush1.msra.mxu0 0.0
        %523 = vmatprep.subr.mxu0 0.0
        %524 = vmatpush1.msra.mxu0 0.0
        %525 = vmatprep.subr.mxu0 0.0
        %526 = vmatpush1.msra.mxu0 0.0
        %527 = vmatprep.subr.mxu0 0.0
        %528 = vmatpush1.msra.mxu0 %v492
        %529 = vmatprep.subr.mxu0 0.0
        %530 = vmatpush2.msra.mxu0 0.0
        %531 = vmatprep.subr.mxu0 0.0
        %532 = vmatpush2.msra.mxu0 0.0
        %533 = vmatprep.subr.mxu0 0.0
        %534 = vmatpush2.msra.mxu0 0.0
        %535 = vmatprep.subr.mxu0 0.0
        %536 = vmatpush2.msra.mxu0 0.0
        %537 = vmatprep.subr.mxu0 0.0
        %538 = vmatpush2.msra.mxu0 0.0
        %539 = vmatprep.subr.mxu0 0.0
        %540 = vmatpush2.msra.mxu0 0.0
        %541 = vmatprep.subr.mxu0 0.0
        %542 = vmatpush2.msra.mxu0 0.0
        %543 = vmatprep.subr.mxu0 0.0
        %544 = vmatpush2.msra.mxu0 0.0
        %545 = vmatprep.subr.mxu0 0.0
        %546 = vmatpush2.msra.mxu0 0.0
        %547 = vmatprep.subr.mxu0 0.0
        %548 = vmatpush2.msra.mxu0 0.0
        %549 = vmatprep.subr.mxu0 0.0
        %550 = vmatpush2.msra.mxu0 0.0
        %551 = vmatprep.subr.mxu0 0.0
        %552 = vmatpush2.msra.mxu0 0.0
        %553 = vmatprep.subr.mxu0 0.0
        %554 = vmatpush2.msra.mxu0 0.0
        %555 = vmatprep.subr.mxu0 0.0
        %556 = vmatpush2.msra.mxu0 0.0
        %557 = vmatprep.subr.mxu0 0.0
        %558 = vmatpush2.msra.mxu0 0.0
        %559 = vmatprep.subr.mxu0 0.0
        %560 = vmatpush2.msra.mxu0 0.0
        %561 = vmatprep.mubr.f32.mxu0 0.0
        %562 = vmatmul.mubr.f32.gmra.mxu0 %v495
        %v563 = vpop.f32.mrf.mxu0
        %v564 = vadd.f32 0.0, %v563
        %v565 = vpop.f32.mrf.mxu0
        %566 = vdwg.mxu0
        %567 = vrot.lane.b32.xlu0 %v393, 112
        %v568 = vpop.permute.xlu0 %567
        %569 = vrot.lane.b32.xlu0 %v390, 80
        %v570 = vpop.permute.xlu0 %569
        %v571 = vsel %vm403, %v568, 0
        %v573 = vsel %vm403, %v570, 0
        %575 = vmatprep.subr.mxu0 0.0
        %576 = vmatpush1.xpose.msra.mxu0 0.0
        %577 = vmatprep.subr.mxu0 0.0
        %578 = vmatpush1.xpose.msra.mxu0 0.0
        %579 = vmatprep.subr.mxu0 0.0
        %580 = vmatpush1.xpose.msra.mxu0 0.0
        %581 = vmatprep.subr.mxu0 0.0
        %582 = vmatpush1.xpose.msra.mxu0 0.0
        %583 = vmatprep.subr.mxu0 0.0
        %584 = vmatpush1.xpose.msra.mxu0 0.0
        %585 = vmatprep.subr.mxu0 0.0
        %586 = vmatpush1.xpose.msra.mxu0 0.0
        %587 = vmatprep.subr.mxu0 0.0
        %588 = vmatpush1.xpose.msra.mxu0 0.0
        %589 = vmatprep.subr.mxu0 0.0
        %590 = vmatpush1.xpose.msra.mxu0 0.0
        %591 = vmatprep.subr.mxu0 0.0
        %592 = vmatpush1.xpose.msra.mxu0 0.0
        %593 = vmatprep.subr.mxu0 0.0
        %594 = vmatpush1.xpose.msra.mxu0 0.0
        %595 = vmatprep.subr.mxu0 0.0
        %596 = vmatpush1.xpose.msra.mxu0 0.0
        %597 = vmatprep.subr.mxu0 0.0
        %598 = vmatpush1.xpose.msra.mxu0 0.0
        %599 = vmatprep.subr.mxu0 0.0
        %600 = vmatpush1.xpose.msra.mxu0 0.0
        %601 = vmatprep.subr.mxu0 0.0
        %602 = vmatpush1.xpose.msra.mxu0 0.0
        %603 = vmatprep.subr.mxu0 0.0
        %604 = vmatpush1.xpose.msra.mxu0 0.0
        %605 = vmatprep.subr.mxu0 0.0
        %606 = vmatpush1.xpose.msra.mxu0 %v573
        %607 = vmatprep.subr.mxu0 0.0
        %608 = vmatpush2.xpose.msra.mxu0 0.0
        %609 = vmatprep.subr.mxu0 0.0
        %610 = vmatpush2.xpose.msra.mxu0 0.0
        %611 = vmatprep.subr.mxu0 0.0
        %612 = vmatpush2.xpose.msra.mxu0 0.0
        %613 = vmatprep.subr.mxu0 0.0
        %614 = vmatpush2.xpose.msra.mxu0 0.0
        %615 = vmatprep.subr.mxu0 0.0
        %616 = vmatpush2.xpose.msra.mxu0 0.0
        %617 = vmatprep.subr.mxu0 0.0
        %618 = vmatpush2.xpose.msra.mxu0 0.0
        %619 = vmatprep.subr.mxu0 0.0
        %620 = vmatpush2.xpose.msra.mxu0 0.0
        %621 = vmatprep.subr.mxu0 0.0
        %622 = vmatpush2.xpose.msra.mxu0 0.0
        %623 = vmatprep.subr.mxu0 0.0
        %624 = vmatpush2.xpose.msra.mxu0 0.0
        %625 = vmatprep.subr.mxu0 0.0
        %626 = vmatpush2.xpose.msra.mxu0 0.0
        %627 = vmatprep.subr.mxu0 0.0
        %628 = vmatpush2.xpose.msra.mxu0 0.0
        %629 = vmatprep.subr.mxu0 0.0
        %630 = vmatpush2.xpose.msra.mxu0 0.0
        %631 = vmatprep.subr.mxu0 0.0
        %632 = vmatpush2.xpose.msra.mxu0 0.0
        %633 = vmatprep.subr.mxu0 0.0
        %634 = vmatpush2.xpose.msra.mxu0 0.0
        %635 = vmatprep.subr.mxu0 0.0
        %636 = vmatpush2.xpose.msra.mxu0 0.0
        %637 = vmatprep.subr.mxu0 0.0
        %638 = vmatpush2.xpose.msra.mxu0 0.0
        %639 = vmatprep.mubr.f32.mxu0 0.0
        %640 = vmatmul.mubr.f32.gmra.mxu0 %v571
        %v641 = vpop.f32.mrf.mxu0
        %v642 = vadd.f32 %v398, %v641
        %v643 = vpop.f32.mrf.mxu0
        %644 = vdwg.mxu0
        %v645 = vsel %vm479, %v642, -inf
        %646 = vmax.xlane.f32.xlu0 %v645
        %v647 = vpop.xlane.xlu0 %646
        %v648 = vsub.f32 %v642, %v647
        %v649 = vmul.f32 %v648, 1.442695
        %v650 = vpow.pop %v649
        %v651 = vsel %vm479, %v650, 0.0
        %652 = vadd.xlane.f32.xlu0 %v651
        %v653 = vpop.xlane.xlu0 %652
        %v654 = vrcp.pop %v653
        %v655 = vmul.f32 %v650, %v654
        %656 = vrot.lane.b32.xlu0 %v390, 48
        %v657 = vpop.permute.xlu0 %656
        %v660 = vsel %vm479, %v655, 0
        %662 = vmatprep.subr.mxu0 0.0
        %663 = vmatpush1.msra.mxu0 0.0
        %664 = vmatprep.subr.mxu0 0.0
        %665 = vmatpush1.msra.mxu0 0.0
        %666 = vmatprep.subr.mxu0 0.0
        %667 = vmatpush1.msra.mxu0 0.0
        %668 = vmatprep.subr.mxu0 0.0
        %669 = vmatpush1.msra.mxu0 0.0
        %670 = vmatprep.subr.mxu0 0.0
        %671 = vmatpush1.msra.mxu0 0.0
        %672 = vmatprep.subr.mxu0 0.0
        %673 = vmatpush1.msra.mxu0 0.0
        %674 = vmatprep.subr.mxu0 0.0
        %675 = vmatpush1.msra.mxu0 0.0
        %676 = vmatprep.subr.mxu0 0.0
        %677 = vmatpush1.msra.mxu0 0.0
        %678 = vmatprep.subr.mxu0 0.0
        %679 = vmatpush1.msra.mxu0 0.0
        %680 = vmatprep.subr.mxu0 0.0
        %681 = vmatpush1.msra.mxu0 0.0
        %682 = vmatprep.subr.mxu0 0.0
        %683 = vmatpush1.msra.mxu0 0.0
        %684 = vmatprep.subr.mxu0 0.0
        %685 = vmatpush1.msra.mxu0 0.0
        %686 = vmatprep.subr.mxu0 0.0
        %687 = vmatpush1.msra.mxu0 0.0
        %688 = vmatprep.subr.mxu0 0.0
        %689 = vmatpush1.msra.mxu0 0.0
        %690 = vmatprep.subr.mxu0 0.0
        %691 = vmatpush1.msra.mxu0 0.0
        %692 = vmatprep.subr.mxu0 0.0
        %693 = vmatpush1.msra.mxu0 %v657
        %694 = vmatprep.subr.mxu0 0.0
        %695 = vmatpush2.msra.mxu0 0.0
        %696 = vmatprep.subr.mxu0 0.0
        %697 = vmatpush2.msra.mxu0 0.0
        %698 = vmatprep.subr.mxu0 0.0
        %699 = vmatpush2.msra.mxu0 0.0
        %700 = vmatprep.subr.mxu0 0.0
        %701 = vmatpush2.msra.mxu0 0.0
        %702 = vmatprep.subr.mxu0 0.0
        %703 = vmatpush2.msra.mxu0 0.0
        %704 = vmatprep.subr.mxu0 0.0
        %705 = vmatpush2.msra.mxu0 0.0
        %706 = vmatprep.subr.mxu0 0.0
        %707 = vmatpush2.msra.mxu0 0.0
        %708 = vmatprep.subr.mxu0 0.0
        %709 = vmatpush2.msra.mxu0 0.0
        %710 = vmatprep.subr.mxu0 0.0
        %711 = vmatpush2.msra.mxu0 0.0
        %712 = vmatprep.subr.mxu0 0.0
        %713 = vmatpush2.msra.mxu0 0.0
        %714 = vmatprep.subr.mxu0 0.0
        %715 = vmatpush2.msra.mxu0 0.0
        %716 = vmatprep.subr.mxu0 0.0
        %717 = vmatpush2.msra.mxu0 0.0
        %718 = vmatprep.subr.mxu0 0.0
        %719 = vmatpush2.msra.mxu0 0.0
        %720 = vmatprep.subr.mxu0 0.0
        %721 = vmatpush2.msra.mxu0 0.0
        %722 = vmatprep.subr.mxu0 0.0
        %723 = vmatpush2.msra.mxu0 0.0
        %724 = vmatprep.subr.mxu0 0.0
        %725 = vmatpush2.msra.mxu0 0.0
        %726 = vmatprep.mubr.f32.mxu0 0.0
        %727 = vmatmul.mubr.f32.gmra.mxu0 %v660
        %v728 = vpop.f32.mrf.mxu0
        %v729 = vadd.f32 0.0, %v728
        %v730 = vpop.f32.mrf.mxu0
        %731 = vdwg.mxu0
        %733 = vrot.lane.b32.xlu0 %v729, 16
        %v734 = vpop.permute.xlu0 %733
        %v736 = vsel %vm403, %v564, %v734
        %v737 = vlaneseq
        %v738 = vshrl.u32 %v737, 7
        %v739 = vsub.s32 0, %v738
        %v740 = vrot.slane %v309, %v739
        %v742 = vsel %vm259, %v736, 0
        %744 = vmatprep.subr.mxu0 0.0
        %745 = vmatpush1.msra.mxu0 0.0
        %746 = vmatprep.subr.mxu0 0.0
        %747 = vmatpush1.msra.mxu0 0.0
        %748 = vmatprep.subr.mxu0 0.0
        %749 = vmatpush1.msra.mxu0 0.0
        %750 = vmatprep.subr.mxu0 0.0
        %751 = vmatpush1.msra.mxu0 0.0
        %752 = vmatprep.subr.mxu0 0.0
        %753 = vmatpush1.msra.mxu0 0.0
        %754 = vmatprep.subr.mxu0 0.0
        %755 = vmatpush1.msra.mxu0 0.0
        %756 = vmatprep.subr.mxu0 0.0
        %757 = vmatpush1.msra.mxu0 0.0
        %758 = vmatprep.subr.mxu0 0.0
        %759 = vmatpush1.msra.mxu0 0.0
        %760 = vmatprep.subr.mxu0 0.0
        %761 = vmatpush1.msra.mxu0 0.0
        %762 = vmatprep.subr.mxu0 0.0
        %763 = vmatpush1.msra.mxu0 0.0
        %764 = vmatprep.subr.mxu0 0.0
        %765 = vmatpush1.msra.mxu0 0.0
        %766 = vmatprep.subr.mxu0 0.0
        %767 = vmatpush1.msra.mxu0 0.0
        %768 = vmatprep.subr.mxu0 0.0
        %769 = vmatpush1.msra.mxu0 %v295
        %770 = vmatprep.subr.mxu0 0.0
        %771 = vmatpush1.msra.mxu0 %v294
        %772 = vmatprep.subr.mxu0 0.0
        %773 = vmatpush1.msra.mxu0 %v293
        %774 = vmatprep.subr.mxu0 0.0
        %775 = vmatpush1.msra.mxu0 %v292
        %776 = vmatprep.subr.mxu0 0.0
        %777 = vmatpush2.msra.mxu0 0.0
        %778 = vmatprep.subr.mxu0 0.0
        %779 = vmatpush2.msra.mxu0 0.0
        %780 = vmatprep.subr.mxu0 0.0
        %781 = vmatpush2.msra.mxu0 0.0
        %782 = vmatprep.subr.mxu0 0.0
        %783 = vmatpush2.msra.mxu0 0.0
        %784 = vmatprep.subr.mxu0 0.0
        %785 = vmatpush2.msra.mxu0 0.0
        %786 = vmatprep.subr.mxu0 0.0
        %787 = vmatpush2.msra.mxu0 0.0
        %788 = vmatprep.subr.mxu0 0.0
        %789 = vmatpush2.msra.mxu0 0.0
        %790 = vmatprep.subr.mxu0 0.0
        %791 = vmatpush2.msra.mxu0 0.0
        %792 = vmatprep.subr.mxu0 0.0
        %793 = vmatpush2.msra.mxu0 0.0
        %794 = vmatprep.subr.mxu0 0.0
        %795 = vmatpush2.msra.mxu0 0.0
        %796 = vmatprep.subr.mxu0 0.0
        %797 = vmatpush2.msra.mxu0 0.0
        %798 = vmatprep.subr.mxu0 0.0
        %799 = vmatpush2.msra.mxu0 0.0
        %800 = vmatprep.subr.mxu0 0.0
        %801 = vmatpush2.msra.mxu0 0.0
        %802 = vmatprep.subr.mxu0 0.0
        %803 = vmatpush2.msra.mxu0 0.0
        %804 = vmatprep.subr.mxu0 0.0
        %805 = vmatpush2.msra.mxu0 0.0
        %806 = vmatprep.subr.mxu0 0.0
        %807 = vmatpush2.msra.mxu0 0.0
        %808 = vmatprep.mubr.f32.mxu0 0.0
        %809 = vmatmul.mubr.f32.gmra.mxu0 %v742
        %v810 = vpop.f32.mrf.mxu0
        %v811 = vadd.f32 %v740, %v810
        %v812 = vpop.f32.mrf.mxu0
        %813 = vdwg.mxu0
        %v814 = vadd.f32 %v283, %v811
        %v815 = vsel %vm259, %v814, 0.0
        %816 = vadd.xlane.f32.xlu0 %v815
        %v817 = vpop.xlane.xlu0 %816
        %v818 = vmul.f32 %v817, %v263
        %v819 = vsub.f32 %v814, %v818
        %v820 = vmul.f32 %v819, %v819
        %v821 = vsel %vm259, %v820, 0.0
        %822 = vadd.xlane.f32.xlu0 %v821
        %v823 = vpop.xlane.xlu0 %822
        %v824 = vmul.f32 %v823, %v263
        %v825 = vadd.f32 %v824, 1e-12
        %v826 = vrsqrt.pop %v825
        %v827 = vmul.f32 %v819, %v826
        %v828 = vlaneseq
        %v829 = vshrl.u32 %v828, 7
        %v830 = vsub.s32 0, %v829
        %v831 = vrot.slane %v310, %v830
        %v832 = vmul.f32 %v827, %v831
        %v833 = vlaneseq
        %v834 = vshrl.u32 %v833, 7
        %v835 = vsub.s32 0, %v834
        %v836 = vrot.slane %v311, %v835
        %v837 = vadd.f32 %v832, %v836
        %v838 = vlaneseq
        %v839 = vshrl.u32 %v838, 7
        %v840 = vsub.s32 0, %v839
        %v841 = vrot.slane %v312, %v840
        %v843 = vsel %vm259, %v837, 0
        %845 = vmatprep.subr.mxu0 0.0
        %846 = vmatpush1.msra.mxu0 0.0
        %847 = vmatprep.subr.mxu0 0.0
        %848 = vmatpush1.msra.mxu0 0.0
        %849 = vmatprep.subr.mxu0 0.0
        %850 = vmatpush1.msra.mxu0 0.0
        %851 = vmatprep.subr.mxu0 0.0
        %852 = vmatpush1.msra.mxu0 0.0
        %853 = vmatprep.subr.mxu0 0.0
        %854 = vmatpush1.msra.mxu0 0.0
        %855 = vmatprep.subr.mxu0 0.0
        %856 = vmatpush1.msra.mxu0 0.0
        %857 = vmatprep.subr.mxu0 0.0
        %858 = vmatpush1.msra.mxu0 0.0
        %859 = vmatprep.subr.mxu0 0.0
        %860 = vmatpush1.msra.mxu0 0.0
        %861 = vmatprep.subr.mxu0 0.0
        %862 = vmatpush1.msra.mxu0 0.0
        %863 = vmatprep.subr.mxu0 0.0
        %864 = vmatpush1.msra.mxu0 0.0
        %865 = vmatprep.subr.mxu0 0.0
        %866 = vmatpush1.msra.mxu0 0.0
        %867 = vmatprep.subr.mxu0 0.0
        %868 = vmatpush1.msra.mxu0 0.0
        %869 = vmatprep.subr.mxu0 0.0
        %870 = vmatpush1.msra.mxu0 %v299
        %871 = vmatprep.subr.mxu0 0.0
        %872 = vmatpush1.msra.mxu0 %v298
        %873 = vmatprep.subr.mxu0 0.0
        %874 = vmatpush1.msra.mxu0 %v297
        %875 = vmatprep.subr.mxu0 0.0
        %876 = vmatpush1.msra.mxu0 %v296
        %877 = vmatprep.subr.mxu0 0.0
        %878 = vmatpush2.msra.mxu0 0.0
        %879 = vmatprep.subr.mxu0 0.0
        %880 = vmatpush2.msra.mxu0 0.0
        %881 = vmatprep.subr.mxu0 0.0
        %882 = vmatpush2.msra.mxu0 0.0
        %883 = vmatprep.subr.mxu0 0.0
        %884 = vmatpush2.msra.mxu0 0.0
        %885 = vmatprep.subr.mxu0 0.0
        %886 = vmatpush2.msra.mxu0 0.0
        %887 = vmatprep.subr.mxu0 0.0
        %888 = vmatpush2.msra.mxu0 0.0
        %889 = vmatprep.subr.mxu0 0.0
        %890 = vmatpush2.msra.mxu0 0.0
        %891 = vmatprep.subr.mxu0 0.0
        %892 = vmatpush2.msra.mxu0 0.0
        %893 = vmatprep.subr.mxu0 0.0
        %894 = vmatpush2.msra.mxu0 0.0
        %895 = vmatprep.subr.mxu0 0.0
        %896 = vmatpush2.msra.mxu0 0.0
        %897 = vmatprep.subr.mxu0 0.0
        %898 = vmatpush2.msra.mxu0 0.0
        %899 = vmatprep.subr.mxu0 0.0
        %900 = vmatpush2.msra.mxu0 0.0
        %901 = vmatprep.subr.mxu0 0.0
        %902 = vmatpush2.msra.mxu0 0.0
        %903 = vmatprep.subr.mxu0 0.0
        %904 = vmatpush2.msra.mxu0 0.0
        %905 = vmatprep.subr.mxu0 0.0
        %906 = vmatpush2.msra.mxu0 0.0
        %907 = vmatprep.subr.mxu0 0.0
        %908 = vmatpush2.msra.mxu0 0.0
        %909 = vmatprep.mubr.f32.mxu0 0.0
        %910 = vmatmul.mubr.f32.gmra.mxu0 %v843
        %v911 = vpop.f32.mrf.mxu0
        %v912 = vadd.f32 %v841, %v911
        %v913 = vpop.f32.mrf.mxu0
        %914 = vdwg.mxu0
        %v915 = vmul.f32 %v912, %v912
        %v916 = vmul.f32 %v912, %v915
        %v917 = vmul.f32 %v916, 0.044715
        %v918 = vadd.f32 %v912, %v917
        %v919 = vmul.f32 %v918, 0.7978846
        %v920 = vtanh.pop %v919
        %v921 = vadd.f32 %v920, 1.0
        %v922 = vmul.f32 %v921, 0.5
        %v923 = vmul.f32 %v912, %v922
        %v924 = vlaneseq
        %v925 = vshrl.u32 %v924, 7
        %v926 = vsub.s32 0, %v925
        %v927 = vrot.slane %v313, %v926
        %vm928 = vcmask 523264
        %v930 = vsel %vm928, %v923, 0
        %932 = vmatprep.subr.mxu0 0.0
        %933 = vmatpush1.msra.mxu0 0.0
        %934 = vmatprep.subr.mxu0 0.0
        %935 = vmatpush1.msra.mxu0 0.0
        %936 = vmatprep.subr.mxu0 0.0
        %937 = vmatpush1.msra.mxu0 0.0
        %938 = vmatprep.subr.mxu0 0.0
        %939 = vmatpush1.msra.mxu0 0.0
        %940 = vmatprep.subr.mxu0 0.0
        %941 = vmatpush1.msra.mxu0 0.0
        %942 = vmatprep.subr.mxu0 0.0
        %943 = vmatpush1.msra.mxu0 0.0
        %944 = vmatprep.subr.mxu0 0.0
        %945 = vmatpush1.msra.mxu0 0.0
        %946 = vmatprep.subr.mxu0 0.0
        %947 = vmatpush1.msra.mxu0 0.0
        %948 = vmatprep.subr.mxu0 0.0
        %949 = vmatpush1.msra.mxu0 %v307
        %950 = vmatprep.subr.mxu0 0.0
        %951 = vmatpush1.msra.mxu0 %v306
        %952 = vmatprep.subr.mxu0 0.0
        %953 = vmatpush1.msra.mxu0 %v305
        %954 = vmatprep.subr.mxu0 0.0
        %955 = vmatpush1.msra.mxu0 %v304
        %956 = vmatprep.subr.mxu0 0.0
        %957 = vmatpush1.msra.mxu0 %v303
        %958 = vmatprep.subr.mxu0 0.0
        %959 = vmatpush1.msra.mxu0 %v302
        %960 = vmatprep.subr.mxu0 0.0
        %961 = vmatpush1.msra.mxu0 %v301
        %962 = vmatprep.subr.mxu0 0.0
        %963 = vmatpush1.msra.mxu0 %v300
        %964 = vmatprep.subr.mxu0 0.0
        %965 = vmatpush2.msra.mxu0 0.0
        %966 = vmatprep.subr.mxu0 0.0
        %967 = vmatpush2.msra.mxu0 0.0
        %968 = vmatprep.subr.mxu0 0.0
        %969 = vmatpush2.msra.mxu0 0.0
        %970 = vmatprep.subr.mxu0 0.0
        %971 = vmatpush2.msra.mxu0 0.0
        %972 = vmatprep.subr.mxu0 0.0
        %973 = vmatpush2.msra.mxu0 0.0
        %974 = vmatprep.subr.mxu0 0.0
        %975 = vmatpush2.msra.mxu0 0.0
        %976 = vmatprep.subr.mxu0 0.0
        %977 = vmatpush2.msra.mxu0 0.0
        %978 = vmatprep.subr.mxu0 0.0
        %979 = vmatpush2.msra.mxu0 0.0
        %980 = vmatprep.subr.mxu0 0.0
        %981 = vmatpush2.msra.mxu0 0.0
        %982 = vmatprep.subr.mxu0 0.0
        %983 = vmatpush2.msra.mxu0 0.0
        %984 = vmatprep.subr.mxu0 0.0
        %985 = vmatpush2.msra.mxu0 0.0
        %986 = vmatprep.subr.mxu0 0.0
        %987 = vmatpush2.msra.mxu0 0.0
        %988 = vmatprep.subr.mxu0 0.0
        %989 = vmatpush2.msra.mxu0 0.0
        %990 = vmatprep.subr.mxu0 0.0
        %991 = vmatpush2.msra.mxu0 0.0
        %992 = vmatprep.subr.mxu0 0.0
        %993 = vmatpush2.msra.mxu0 0.0
        %994 = vmatprep.subr.mxu0 0.0
        %995 = vmatpush2.msra.mxu0 0.0
        %996 = vmatprep.mubr.f32.mxu0 0.0
        %997 = vmatmul.mubr.f32.gmra.mxu0 %v930
        %v998 = vpop.f32.mrf.mxu0
        %v999 = vadd.f32 %v927, %v998
        %v1000 = vpop.f32.mrf.mxu0
        %1001 = vdwg.mxu0
        %v1002 = vadd.f32 %v837, %v999
        %v1003 = vsel %vm259, %v1002, 0.0
        %1004 = vadd.xlane.f32.xlu0 %v1003
        %v1005 = vpop.xlane.xlu0 %1004
        %v1006 = vmul.f32 %v1005, %v263
        %v1007 = vsub.f32 %v1002, %v1006
        %v1008 = vmul.f32 %v1007, %v1007
        %v1009 = vsel %vm259, %v1008, 0.0
        %1010 = vadd.xlane.f32.xlu0 %v1009
        %v1011 = vpop.xlane.xlu0 %1010
        %v1012 = vmul.f32 %v1011, %v263
        %v1013 = vadd.f32 %v1012, 1e-12
        %v1014 = vrsqrt.pop %v1013
        %v1015 = vmul.f32 %v1007, %v1014
        %v1016 = vlaneseq
        %v1017 = vshrl.u32 %v1016, 7
        %v1018 = vsub.s32 0, %v1017
        %v1019 = vrot.slane %v314, %v1018
        %v1020 = vmul.f32 %v1015, %v1019
        %v1021 = vlaneseq
        %v1022 = vshrl.u32 %v1021, 7
        %v1023 = vsub.s32 0, %v1022
        %v1024 = vrot.slane %v315, %v1023
        %v1025 = vadd.f32 %v1020, %v1024
        %s1026 = scalar_lea.vmem %s238, 8 [#allocation4]
        %1027 = vst.msk [vmem:[%s1026] sm:$0xff] %vm259, %v1025
        %v1028 = vld [vmem:[#allocation2 + $0xa8] sm:$0xff]
        %v1029 = vld [vmem:[#allocation2 + $0xb0] sm:$0xff]
        %v1030 = vld [vmem:[#allocation2 + $0xb8] sm:$0xff]
        %v1031 = vld [vmem:[#allocation2 + $0xc0] sm:$0xff]
        %v1032 = vld [vmem:[#allocation2 + $0xc8] sm:$0xff]
        %v1033 = vld [vmem:[#allocation2 + $0xd0] sm:$0xff]
        %v1034 = vld [vmem:[#allocation2 + $0xd8] sm:$0xff]
        %v1035 = vld [vmem:[#allocation2 + $0xe0] sm:$0xff]
        %v1036 = vld [vmem:[#allocation2 + $0xe8] sm:$0xff]
        %v1037 = vld [vmem:[#allocation2 + $0xf0] sm:$0xff]
        %v1038 = vld [vmem:[#allocation2 + $0xf8] sm:$0xff]
        %v1039 = vld [vmem:[#allocation2 + $0x100] sm:$0xff]
        %v1040 = vld [vmem:[#allocation2 + $0x108] sm:$0xff]
        %v1041 = vld [vmem:[#allocation2 + $0x110] sm:$0xff]
        %v1042 = vld [vmem:[#allocation2 + $0x118] sm:$0xff]
        %v1043 = vld [vmem:[#allocation2 + $0x120] sm:$0xff]
        %v1044 = vld [vmem:[#allocation2 + $0x128] sm:$0xff]
        %v1045 = vld [vmem:[#allocation2 + $0x130] sm:$0xff]
        %v1046 = vld [vmem:[#allocation2 + $0x138] sm:$0xff]
        %v1047 = vld [vmem:[#allocation2 + $0x140] sm:$0xff]
        %v1048 = vld [vmem:[#allocation2 + $0x148] sm:$0x1]
        %v1049 = vld [vmem:[#allocation2 + $0x149] sm:$0x1]
        %v1050 = vld [vmem:[#allocation2 + $0x14a] sm:$0x1]
        %v1051 = vld [vmem:[#allocation2 + $0x14b] sm:$0x1]
        %v1052 = vld [vmem:[#allocation2 + $0x14c] sm:$0x1]
        %v1053 = vld [vmem:[#allocation2 + $0x14d] sm:$0x1]
        %v1054 = vld [vmem:[#allocation2 + $0x14e] sm:$0x1]
        %v1055 = vld [vmem:[#allocation2 + $0x14f] sm:$0x1]
        %v1056 = vlaneseq
        %v1057 = vshrl.u32 %v1056, 7
        %v1058 = vsub.s32 0, %v1057
        %v1059 = vrot.slane %v1048, %v1058
        %v1061 = vsel %vm259, %v1025, 0
        %1063 = vmatprep.subr.mxu0 0.0
        %1064 = vmatpush1.msra.mxu0 0.0
        %1065 = vmatprep.subr.mxu0 0.0
        %1066 = vmatpush1.msra.mxu0 0.0
        %1067 = vmatprep.subr.mxu0 0.0
        %1068 = vmatpush1.msra.mxu0 0.0
        %1069 = vmatprep.subr.mxu0 0.0
        %1070 = vmatpush1.msra.mxu0 0.0
        %1071 = vmatprep.subr.mxu0 0.0
        %1072 = vmatpush1.msra.mxu0 0.0
        %1073 = vmatprep.subr.mxu0 0.0
        %1074 = vmatpush1.msra.mxu0 0.0
        %1075 = vmatprep.subr.mxu0 0.0
        %1076 = vmatpush1.msra.mxu0 0.0
        %1077 = vmatprep.subr.mxu0 0.0
        %1078 = vmatpush1.msra.mxu0 0.0
        %1079 = vmatprep.subr.mxu0 0.0
        %1080 = vmatpush1.msra.mxu0 0.0
        %1081 = vmatprep.subr.mxu0 0.0
        %1082 = vmatpush1.msra.mxu0 0.0
        %1083 = vmatprep.subr.mxu0 0.0
        %1084 = vmatpush1.msra.mxu0 0.0
        %1085 = vmatprep.subr.mxu0 0.0
        %1086 = vmatpush1.msra.mxu0 0.0
        %1087 = vmatprep.subr.mxu0 0.0
        %1088 = vmatpush1.msra.mxu0 %v1031
        %1089 = vmatprep.subr.mxu0 0.0
        %1090 = vmatpush1.msra.mxu0 %v1030
        %1091 = vmatprep.subr.mxu0 0.0
        %1092 = vmatpush1.msra.mxu0 %v1029
        %1093 = vmatprep.subr.mxu0 0.0
        %1094 = vmatpush1.msra.mxu0 %v1028
        %1095 = vmatprep.subr.mxu0 0.0
        %1096 = vmatpush2.msra.mxu0 0.0
        %1097 = vmatprep.subr.mxu0 0.0
        %1098 = vmatpush2.msra.mxu0 0.0
        %1099 = vmatprep.subr.mxu0 0.0
        %1100 = vmatpush2.msra.mxu0 0.0
        %1101 = vmatprep.subr.mxu0 0.0
        %1102 = vmatpush2.msra.mxu0 0.0
        %1103 = vmatprep.subr.mxu0 0.0
        %1104 = vmatpush2.msra.mxu0 0.0
        %1105 = vmatprep.subr.mxu0 0.0
        %1106 = vmatpush2.msra.mxu0 0.0
        %1107 = vmatprep.subr.mxu0 0.0
        %1108 = vmatpush2.msra.mxu0 0.0
        %1109 = vmatprep.subr.mxu0 0.0
        %1110 = vmatpush2.msra.mxu0 0.0
        %1111 = vmatprep.subr.mxu0 0.0
        %1112 = vmatpush2.msra.mxu0 0.0
        %1113 = vmatprep.subr.mxu0 0.0
        %1114 = vmatpush2.msra.mxu0 0.0
        %1115 = vmatprep.subr.mxu0 0.0
        %1116 = vmatpush2.msra.mxu0 0.0
        %1117 = vmatprep.subr.mxu0 0.0
        %1118 = vmatpush2.msra.mxu0 0.0
        %1119 = vmatprep.subr.mxu0 0.0
        %1120 = vmatpush2.msra.mxu0 0.0
        %1121 = vmatprep.subr.mxu0 0.0
        %1122 = vmatpush2.msra.mxu0 0.0
        %1123 = vmatprep.subr.mxu0 0.0
        %1124 = vmatpush2.msra.mxu0 0.0
        %1125 = vmatprep.subr.mxu0 0.0
        %1126 = vmatpush2.msra.mxu0 0.0
        %1127 = vmatprep.mubr.f32.mxu0 0.0
        %1128 = vmatmul.mubr.f32.gmra.mxu0 %v1061
        %v1129 = vpop.f32.mrf.mxu0
        %v1130 = vadd.f32 %v1059, %v1129
        %v1131 = vpop.f32.mrf.mxu0
        %1132 = vdwg.mxu0
        %v1133 = vmul.f32 %v1130, 0.25
        %1135 = vrot.lane.b32.xlu0 %v1130, 96
        %v1136 = vpop.permute.xlu0 %1135
        %v1138 = vsel %vm403, %v1133, 0
        %v1140 = vsel %vm403, %v1136, 0
        %1142 = vmatprep.subr.mxu0 0.0
        %1143 = vmatpush1.xpose.msra.mxu0 0.0
        %1144 = vmatprep.subr.mxu0 0.0
        %1145 = vmatpush1.xpose.msra.mxu0 0.0
        %1146 = vmatprep.subr.mxu0 0.0
        %1147 = vmatpush1.xpose.msra.mxu0 0.0
        %1148 = vmatprep.subr.mxu0 0.0
        %1149 = vmatpush1.xpose.msra.mxu0 0.0
        %1150 = vmatprep.subr.mxu0 0.0
        %1151 = vmatpush1.xpose.msra.mxu0 0.0
        %1152 = vmatprep.subr.mxu0 0.0
        %1153 = vmatpush1.xpose.msra.mxu0 0.0
        %1154 = vmatprep.subr.mxu0 0.0
        %1155 = vmatpush1.xpose.msra.mxu0 0.0
        %1156 = vmatprep.subr.mxu0 0.0
        %1157 = vmatpush1.xpose.msra.mxu0 0.0
        %1158 = vmatprep.subr.mxu0 0.0
        %1159 = vmatpush1.xpose.msra.mxu0 0.0
        %1160 = vmatprep.subr.mxu0 0.0
        %1161 = vmatpush1.xpose.msra.mxu0 0.0
        %1162 = vmatprep.subr.mxu0 0.0
        %1163 = vmatpush1.xpose.msra.mxu0 0.0
        %1164 = vmatprep.subr.mxu0 0.0
        %1165 = vmatpush1.xpose.msra.mxu0 0.0
        %1166 = vmatprep.subr.mxu0 0.0
        %1167 = vmatpush1.xpose.msra.mxu0 0.0
        %1168 = vmatprep.subr.mxu0 0.0
        %1169 = vmatpush1.xpose.msra.mxu0 0.0
        %1170 = vmatprep.subr.mxu0 0.0
        %1171 = vmatpush1.xpose.msra.mxu0 0.0
        %1172 = vmatprep.subr.mxu0 0.0
        %1173 = vmatpush1.xpose.msra.mxu0 %v1140
        %1174 = vmatprep.subr.mxu0 0.0
        %1175 = vmatpush2.xpose.msra.mxu0 0.0
        %1176 = vmatprep.subr.mxu0 0.0
        %1177 = vmatpush2.xpose.msra.mxu0 0.0
        %1178 = vmatprep.subr.mxu0 0.0
        %1179 = vmatpush2.xpose.msra.mxu0 0.0
        %1180 = vmatprep.subr.mxu0 0.0
        %1181 = vmatpush2.xpose.msra.mxu0 0.0
        %1182 = vmatprep.subr.mxu0 0.0
        %1183 = vmatpush2.xpose.msra.mxu0 0.0
        %1184 = vmatprep.subr.mxu0 0.0
        %1185 = vmatpush2.xpose.msra.mxu0 0.0
        %1186 = vmatprep.subr.mxu0 0.0
        %1187 = vmatpush2.xpose.msra.mxu0 0.0
        %1188 = vmatprep.subr.mxu0 0.0
        %1189 = vmatpush2.xpose.msra.mxu0 0.0
        %1190 = vmatprep.subr.mxu0 0.0
        %1191 = vmatpush2.xpose.msra.mxu0 0.0
        %1192 = vmatprep.subr.mxu0 0.0
        %1193 = vmatpush2.xpose.msra.mxu0 0.0
        %1194 = vmatprep.subr.mxu0 0.0
        %1195 = vmatpush2.xpose.msra.mxu0 0.0
        %1196 = vmatprep.subr.mxu0 0.0
        %1197 = vmatpush2.xpose.msra.mxu0 0.0
        %1198 = vmatprep.subr.mxu0 0.0
        %1199 = vmatpush2.xpose.msra.mxu0 0.0
        %1200 = vmatprep.subr.mxu0 0.0
        %1201 = vmatpush2.xpose.msra.mxu0 0.0
        %1202 = vmatprep.subr.mxu0 0.0
        %1203 = vmatpush2.xpose.msra.mxu0 0.0
        %1204 = vmatprep.subr.mxu0 0.0
        %1205 = vmatpush2.xpose.msra.mxu0 0.0
        %1206 = vmatprep.mubr.f32.mxu0 0.0
        %1207 = vmatmul.mubr.f32.gmra.mxu0 %v1138
        %v1208 = vpop.f32.mrf.mxu0
        %v1209 = vadd.f32 %v398, %v1208
        %v1210 = vpop.f32.mrf.mxu0
        %1211 = vdwg.mxu0
        %v1212 = vsel %vm479, %v1209, -inf
        %1213 = vmax.xlane.f32.xlu0 %v1212
        %v1214 = vpop.xlane.xlu0 %1213
        %v1215 = vsub.f32 %v1209, %v1214
        %v1216 = vmul.f32 %v1215, 1.442695
        %v1217 = vpow.pop %v1216
        %v1218 = vsel %vm479, %v1217, 0.0
        %1219 = vadd.xlane.f32.xlu0 %v1218
        %v1220 = vpop.xlane.xlu0 %1219
        %v1221 = vrcp.pop %v1220
        %v1222 = vmul.f32 %v1217, %v1221
        %1223 = vrot.lane.b32.xlu0 %v1130, 64
        %v1224 = vpop.permute.xlu0 %1223
        %v1227 = vsel %vm479, %v1222, 0
        %1229 = vmatprep.subr.mxu0 0.0
        %1230 = vmatpush1.msra.mxu0 0.0
        %1231 = vmatprep.subr.mxu0 0.0
        %1232 = vmatpush1.msra.mxu0 0.0
        %1233 = vmatprep.subr.mxu0 0.0
        %1234 = vmatpush1.msra.mxu0 0.0
        %1235 = vmatprep.subr.mxu0 0.0
        %1236 = vmatpush1.msra.mxu0 0.0
        %1237 = vmatprep.subr.mxu0 0.0
        %1238 = vmatpush1.msra.mxu0 0.0
        %1239 = vmatprep.subr.mxu0 0.0
        %1240 = vmatpush1.msra.mxu0 0.0
        %1241 = vmatprep.subr.mxu0 0.0
        %1242 = vmatpush1.msra.mxu0 0.0
        %1243 = vmatprep.subr.mxu0 0.0
        %1244 = vmatpush1.msra.mxu0 0.0
        %1245 = vmatprep.subr.mxu0 0.0
        %1246 = vmatpush1.msra.mxu0 0.0
        %1247 = vmatprep.subr.mxu0 0.0
        %1248 = vmatpush1.msra.mxu0 0.0
        %1249 = vmatprep.subr.mxu0 0.0
        %1250 = vmatpush1.msra.mxu0 0.0
        %1251 = vmatprep.subr.mxu0 0.0
        %1252 = vmatpush1.msra.mxu0 0.0
        %1253 = vmatprep.subr.mxu0 0.0
        %1254 = vmatpush1.msra.mxu0 0.0
        %1255 = vmatprep.subr.mxu0 0.0
        %1256 = vmatpush1.msra.mxu0 0.0
        %1257 = vmatprep.subr.mxu0 0.0
        %1258 = vmatpush1.msra.mxu0 0.0
        %1259 = vmatprep.subr.mxu0 0.0
        %1260 = vmatpush1.msra.mxu0 %v1224
        %1261 = vmatprep.subr.mxu0 0.0
        %1262 = vmatpush2.msra.mxu0 0.0
        %1263 = vmatprep.subr.mxu0 0.0
        %1264 = vmatpush2.msra.mxu0 0.0
        %1265 = vmatprep.subr.mxu0 0.0
        %1266 = vmatpush2.msra.mxu0 0.0
        %1267 = vmatprep.subr.mxu0 0.0
        %1268 = vmatpush2.msra.mxu0 0.0
        %1269 = vmatprep.subr.mxu0 0.0
        %1270 = vmatpush2.msra.mxu0 0.0
        %1271 = vmatprep.subr.mxu0 0.0
        %1272 = vmatpush2.msra.mxu0 0.0
        %1273 = vmatprep.subr.mxu0 0.0
        %1274 = vmatpush2.msra.mxu0 0.0
        %1275 = vmatprep.subr.mxu0 0.0
        %1276 = vmatpush2.msra.mxu0 0.0
        %1277 = vmatprep.subr.mxu0 0.0
        %1278 = vmatpush2.msra.mxu0 0.0
        %1279 = vmatprep.subr.mxu0 0.0
        %1280 = vmatpush2.msra.mxu0 0.0
        %1281 = vmatprep.subr.mxu0 0.0
        %1282 = vmatpush2.msra.mxu0 0.0
        %1283 = vmatprep.subr.mxu0 0.0
        %1284 = vmatpush2.msra.mxu0 0.0
        %1285 = vmatprep.subr.mxu0 0.0
        %1286 = vmatpush2.msra.mxu0 0.0
        %1287 = vmatprep.subr.mxu0 0.0
        %1288 = vmatpush2.msra.mxu0 0.0
        %1289 = vmatprep.subr.mxu0 0.0
        %1290 = vmatpush2.msra.mxu0 0.0
        %1291 = vmatprep.subr.mxu0 0.0
        %1292 = vmatpush2.msra.mxu0 0.0
        %1293 = vmatprep.mubr.f32.mxu0 0.0
        %1294 = vmatmul.mubr.f32.gmra.mxu0 %v1227
        %v1295 = vpop.f32.mrf.mxu0
        %v1296 = vadd.f32 0.0, %v1295
        %v1297 = vpop.f32.mrf.mxu0
        %1298 = vdwg.mxu0
        %1299 = vrot.lane.b32.xlu0 %v1133, 112
        %v1300 = vpop.permute.xlu0 %1299
        %1301 = vrot.lane.b32.xlu0 %v1130, 80
        %v1302 = vpop.permute.xlu0 %1301
        %v1303 = vsel %vm403, %v1300, 0
        %v1305 = vsel %vm403, %v1302, 0
        %1307 = vmatprep.subr.mxu0 0.0
        %1308 = vmatpush1.xpose.msra.mxu0 0.0
        %1309 = vmatprep.subr.mxu0 0.0
        %1310 = vmatpush1.xpose.msra.mxu0 0.0
        %1311 = vmatprep.subr.mxu0 0.0
        %1312 = vmatpush1.xpose.msra.mxu0 0.0
        %1313 = vmatprep.subr.mxu0 0.0
        %1314 = vmatpush1.xpose.msra.mxu0 0.0
        %1315 = vmatprep.subr.mxu0 0.0
        %1316 = vmatpush1.xpose.msra.mxu0 0.0
        %1317 = vmatprep.subr.mxu0 0.0
        %1318 = vmatpush1.xpose.msra.mxu0 0.0
        %1319 = vmatprep.subr.mxu0 0.0
        %1320 = vmatpush1.xpose.msra.mxu0 0.0
        %1321 = vmatprep.subr.mxu0 0.0
        %1322 = vmatpush1.xpose.msra.mxu0 0.0
        %1323 = vmatprep.subr.mxu0 0.0
        %1324 = vmatpush1.xpose.msra.mxu0 0.0
        %1325 = vmatprep.subr.mxu0 0.0
        %1326 = vmatpush1.xpose.msra.mxu0 0.0
        %1327 = vmatprep.subr.mxu0 0.0
        %1328 = vmatpush1.xpose.msra.mxu0 0.0
        %1329 = vmatprep.subr.mxu0 0.0
        %1330 = vmatpush1.xpose.msra.mxu0 0.0
        %1331 = vmatprep.subr.mxu0 0.0
        %1332 = vmatpush1.xpose.msra.mxu0 0.0
        %1333 = vmatprep.subr.mxu0 0.0
        %1334 = vmatpush1.xpose.msra.mxu0 0.0
        %1335 = vmatprep.subr.mxu0 0.0
        %1336 = vmatpush1.xpose.msra.mxu0 0.0
        %1337 = vmatprep.subr.mxu0 0.0
        %1338 = vmatpush1.xpose.msra.mxu0 %v1305
        %1339 = vmatprep.subr.mxu0 0.0
        %1340 = vmatpush2.xpose.msra.mxu0 0.0
        %1341 = vmatprep.subr.mxu0 0.0
        %1342 = vmatpush2.xpose.msra.mxu0 0.0
        %1343 = vmatprep.subr.mxu0 0.0
        %1344 = vmatpush2.xpose.msra.mxu0 0.0
        %1345 = vmatprep.subr.mxu0 0.0
        %1346 = vmatpush2.xpose.msra.mxu0 0.0
        %1347 = vmatprep.subr.mxu0 0.0
        %1348 = vmatpush2.xpose.msra.mxu0 0.0
        %1349 = vmatprep.subr.mxu0 0.0
        %1350 = vmatpush2.xpose.msra.mxu0 0.0
        %1351 = vmatprep.subr.mxu0 0.0
        %1352 = vmatpush2.xpose.msra.mxu0 0.0
        %1353 = vmatprep.subr.mxu0 0.0
        %1354 = vmatpush2.xpose.msra.mxu0 0.0
        %1355 = vmatprep.subr.mxu0 0.0
        %1356 = vmatpush2.xpose.msra.mxu0 0.0
        %1357 = vmatprep.subr.mxu0 0.0
        %1358 = vmatpush2.xpose.msra.mxu0 0.0
        %1359 = vmatprep.subr.mxu0 0.0
        %1360 = vmatpush2.xpose.msra.mxu0 0.0
        %1361 = vmatprep.subr.mxu0 0.0
        %1362 = vmatpush2.xpose.msra.mxu0 0.0
        %1363 = vmatprep.subr.mxu0 0.0
        %1364 = vmatpush2.xpose.msra.mxu0 0.0
        %1365 = vmatprep.subr.mxu0 0.0
        %1366 = vmatpush2.xpose.msra.mxu0 0.0
        %1367 = vmatprep.subr.mxu0 0.0
        %1368 = vmatpush2.xpose.msra.mxu0 0.0
        %1369 = vmatprep.subr.mxu0 0.0
        %1370 = vmatpush2.xpose.msra.mxu0 0.0
        %1371 = vmatprep.mubr.f32.mxu0 0.0
        %1372 = vmatmul.mubr.f32.gmra.mxu0 %v1303
        %v1373 = vpop.f32.mrf.mxu0
        %v1374 = vadd.f32 %v398, %v1373
        %v1375 = vpop.f32.mrf.mxu0
        %1376 = vdwg.mxu0
        %v1377 = vsel %vm479, %v1374, -inf
        %1378 = vmax.xlane.f32.xlu0 %v1377
        %v1379 = vpop.xlane.xlu0 %1378
        %v1380 = vsub.f32 %v1374, %v1379
        %v1381 = vmul.f32 %v1380, 1.442695
        %v1382 = vpow.pop %v1381
        %v1383 = vsel %vm479, %v1382, 0.0
        %1384 = vadd.xlane.f32.xlu0 %v1383
        %v1385 = vpop.xlane.xlu0 %1384
        %v1386 = vrcp.pop %v1385
        %v1387 = vmul.f32 %v1382, %v1386
        %1388 = vrot.lane.b32.xlu0 %v1130, 48
        %v1389 = vpop.permute.xlu0 %1388
        %v1392 = vsel %vm479, %v1387, 0
        %1394 = vmatprep.subr.mxu0 0.0
        %1395 = vmatpush1.msra.mxu0 0.0
        %1396 = vmatprep.subr.mxu0 0.0
        %1397 = vmatpush1.msra.mxu0 0.0
        %1398 = vmatprep.subr.mxu0 0.0
        %1399 = vmatpush1.msra.mxu0 0.0
        %1400 = vmatprep.subr.mxu0 0.0
        %1401 = vmatpush1.msra.mxu0 0.0
        %1402 = vmatprep.subr.mxu0 0.0
        %1403 = vmatpush1.msra.mxu0 0.0
        %1404 = vmatprep.subr.mxu0 0.0
        %1405 = vmatpush1.msra.mxu0 0.0
        %1406 = vmatprep.subr.mxu0 0.0
        %1407 = vmatpush1.msra.mxu0 0.0
        %1408 = vmatprep.subr.mxu0 0.0
        %1409 = vmatpush1.msra.mxu0 0.0
        %1410 = vmatprep.subr.mxu0 0.0
        %1411 = vmatpush1.msra.mxu0 0.0
        %1412 = vmatprep.subr.mxu0 0.0
        %1413 = vmatpush1.msra.mxu0 0.0
        %1414 = vmatprep.subr.mxu0 0.0
        %1415 = vmatpush1.msra.mxu0 0.0
        %1416 = vmatprep.subr.mxu0 0.0
        %1417 = vmatpush1.msra.mxu0 0.0
        %1418 = vmatprep.subr.mxu0 0.0
        %1419 = vmatpush1.msra.mxu0 0.0
        %1420 = vmatprep.subr.mxu0 0.0
        %1421 = vmatpush1.msra.mxu0 0.0
        %1422 = vmatprep.subr.mxu0 0.0
        %1423 = vmatpush1.msra.mxu0 0.0
        %1424 = vmatprep.subr.mxu0 0.0
        %1425 = vmatpush1.msra.mxu0 %v1389
        %1426 = vmatprep.subr.mxu0 0.0
        %1427 = vmatpush2.msra.mxu0 0.0
        %1428 = vmatprep.subr.mxu0 0.0
        %1429 = vmatpush2.msra.mxu0 0.0
        %1430 = vmatprep.subr.mxu0 0.0
        %1431 = vmatpush2.msra.mxu0 0.0
        %1432 = vmatprep.subr.mxu0 0.0
        %1433 = vmatpush2.msra.mxu0 0.0
        %1434 = vmatprep.subr.mxu0 0.0
        %1435 = vmatpush2.msra.mxu0 0.0
        %1436 = vmatprep.subr.mxu0 0.0
        %1437 = vmatpush2.msra.mxu0 0.0
        %1438 = vmatprep.subr.mxu0 0.0
        %1439 = vmatpush2.msra.mxu0 0.0
        %1440 = vmatprep.subr.mxu0 0.0
        %1441 = vmatpush2.msra.mxu0 0.0
        %1442 = vmatprep.subr.mxu0 0.0
        %1443 = vmatpush2.msra.mxu0 0.0
        %1444 = vmatprep.subr.mxu0 0.0
        %1445 = vmatpush2.msra.mxu0 0.0
        %1446 = vmatprep.subr.mxu0 0.0
        %1447 = vmatpush2.msra.mxu0 0.0
        %1448 = vmatprep.subr.mxu0 0.0
        %1449 = vmatpush2.msra.mxu0 0.0
        %1450 = vmatprep.subr.mxu0 0.0
        %1451 = vmatpush2.msra.mxu0 0.0
        %1452 = vmatprep.subr.mxu0 0.0
        %1453 = vmatpush2.msra.mxu0 0.0
        %1454 = vmatprep.subr.mxu0 0.0
        %1455 = vmatpush2.msra.mxu0 0.0
        %1456 = vmatprep.subr.mxu0 0.0
        %1457 = vmatpush2.msra.mxu0 0.0
        %1458 = vmatprep.mubr.f32.mxu0 0.0
        %1459 = vmatmul.mubr.f32.gmra.mxu0 %v1392
        %v1460 = vpop.f32.mrf.mxu0
        %v1461 = vadd.f32 0.0, %v1460
        %v1462 = vpop.f32.mrf.mxu0
        %1463 = vdwg.mxu0
        %1465 = vrot.lane.b32.xlu0 %v1461, 16
        %v1466 = vpop.permute.xlu0 %1465
        %v1468 = vsel %vm403, %v1296, %v1466
        %v1469 = vlaneseq
        %v1470 = vshrl.u32 %v1469, 7
        %v1471 = vsub.s32 0, %v1470
        %v1472 = vrot.slane %v1049, %v1471
        %v1474 = vsel %vm259, %v1468, 0
        %1476 = vmatprep.subr.mxu0 0.0
        %1477 = vmatpush1.msra.mxu0 0.0
        %1478 = vmatprep.subr.mxu0 0.0
        %1479 = vmatpush1.msra.mxu0 0.0
        %1480 = vmatprep.subr.mxu0 0.0
        %1481 = vmatpush1.msra.mxu0 0.0
        %1482 = vmatprep.subr.mxu0 0.0
        %1483 = vmatpush1.msra.mxu0 0.0
        %1484 = vmatprep.subr.mxu0 0.0
        %1485 = vmatpush1.msra.mxu0 0.0
        %1486 = vmatprep.subr.mxu0 0.0
        %1487 = vmatpush1.msra.mxu0 0.0
        %1488 = vmatprep.subr.mxu0 0.0
        %1489 = vmatpush1.msra.mxu0 0.0
        %1490 = vmatprep.subr.mxu0 0.0
        %1491 = vmatpush1.msra.mxu0 0.0
        %1492 = vmatprep.subr.mxu0 0.0
        %1493 = vmatpush1.msra.mxu0 0.0
        %1494 = vmatprep.subr.mxu0 0.0
        %1495 = vmatpush1.msra.mxu0 0.0
        %1496 = vmatprep.subr.mxu0 0.0
        %1497 = vmatpush1.msra.mxu0 0.0
        %1498 = vmatprep.subr.mxu0 0.0
        %1499 = vmatpush1.msra.mxu0 0.0
        %1500 = vmatprep.subr.mxu0 0.0
        %1501 = vmatpush1.msra.mxu0 %v1035
        %1502 = vmatprep.subr.mxu0 0.0
        %1503 = vmatpush1.msra.mxu0 %v1034
        %1504 = vmatprep.subr.mxu0 0.0
        %1505 = vmatpush1.msra.mxu0 %v1033
        %1506 = vmatprep.subr.mxu0 0.0
        %1507 = vmatpush1.msra.mxu0 %v1032
        %1508 = vmatprep.subr.mxu0 0.0
        %1509 = vmatpush2.msra.mxu0 0.0
        %1510 = vmatprep.subr.mxu0 0.0
        %1511 = vmatpush2.msra.mxu0 0.0
        %1512 = vmatprep.subr.mxu0 0.0
        %1513 = vmatpush2.msra.mxu0 0.0
        %1514 = vmatprep.subr.mxu0 0.0
        %1515 = vmatpush2.msra.mxu0 0.0
        %1516 = vmatprep.subr.mxu0 0.0
        %1517 = vmatpush2.msra.mxu0 0.0
        %1518 = vmatprep.subr.mxu0 0.0
        %1519 = vmatpush2.msra.mxu0 0.0
        %1520 = vmatprep.subr.mxu0 0.0
        %1521 = vmatpush2.msra.mxu0 0.0
        %1522 = vmatprep.subr.mxu0 0.0
        %1523 = vmatpush2.msra.mxu0 0.0
        %1524 = vmatprep.subr.mxu0 0.0
        %1525 = vmatpush2.msra.mxu0 0.0
        %1526 = vmatprep.subr.mxu0 0.0
        %1527 = vmatpush2.msra.mxu0 0.0
        %1528 = vmatprep.subr.mxu0 0.0
        %1529 = vmatpush2.msra.mxu0 0.0
        %1530 = vmatprep.subr.mxu0 0.0
        %1531 = vmatpush2.msra.mxu0 0.0
        %1532 = vmatprep.subr.mxu0 0.0
        %1533 = vmatpush2.msra.mxu0 0.0
        %1534 = vmatprep.subr.mxu0 0.0
        %1535 = vmatpush2.msra.mxu0 0.0
        %1536 = vmatprep.subr.mxu0 0.0
        %1537 = vmatpush2.msra.mxu0 0.0
        %1538 = vmatprep.subr.mxu0 0.0
        %1539 = vmatpush2.msra.mxu0 0.0
        %1540 = vmatprep.mubr.f32.mxu0 0.0
        %1541 = vmatmul.mubr.f32.gmra.mxu0 %v1474
        %v1542 = vpop.f32.mrf.mxu0
        %v1543 = vadd.f32 %v1472, %v1542
        %v1544 = vpop.f32.mrf.mxu0
        %1545 = vdwg.mxu0
        %v1546 = vadd.f32 %v1025, %v1543
        %v1547 = vsel %vm259, %v1546, 0.0
        %1548 = vadd.xlane.f32.xlu0 %v1547
        %v1549 = vpop.xlane.xlu0 %1548
        %v1550 = vmul.f32 %v1549, %v263
        %v1551 = vsub.f32 %v1546, %v1550
        %v1552 = vmul.f32 %v1551, %v1551
        %v1553 = vsel %vm259, %v1552, 0.0
        %1554 = vadd.xlane.f32.xlu0 %v1553
        %v1555 = vpop.xlane.xlu0 %1554
        %v1556 = vmul.f32 %v1555, %v263
        %v1557 = vadd.f32 %v1556, 1e-12
        %v1558 = vrsqrt.pop %v1557
        %v1559 = vmul.f32 %v1551, %v1558
        %v1560 = vlaneseq
        %v1561 = vshrl.u32 %v1560, 7
        %v1562 = vsub.s32 0, %v1561
        %v1563 = vrot.slane %v1050, %v1562
        %v1564 = vmul.f32 %v1559, %v1563
        %v1565 = vlaneseq
        %v1566 = vshrl.u32 %v1565, 7
        %v1567 = vsub.s32 0, %v1566
        %v1568 = vrot.slane %v1051, %v1567
        %v1569 = vadd.f32 %v1564, %v1568
        %v1570 = vlaneseq
        %v1571 = vshrl.u32 %v1570, 7
        %v1572 = vsub.s32 0, %v1571
        %v1573 = vrot.slane %v1052, %v1572
        %v1575 = vsel %vm259, %v1569, 0
        %1577 = vmatprep.subr.mxu0 0.0
        %1578 = vmatpush1.msra.mxu0 0.0
        %1579 = vmatprep.subr.mxu0 0.0
        %1580 = vmatpush1.msra.mxu0 0.0
        %1581 = vmatprep.subr.mxu0 0.0
        %1582 = vmatpush1.msra.mxu0 0.0
        %1583 = vmatprep.subr.mxu0 0.0
        %1584 = vmatpush1.msra.mxu0 0.0
        %1585 = vmatprep.subr.mxu0 0.0
        %1586 = vmatpush1.msra.mxu0 0.0
        %1587 = vmatprep.subr.mxu0 0.0
        %1588 = vmatpush1.msra.mxu0 0.0
        %1589 = vmatprep.subr.mxu0 0.0
        %1590 = vmatpush1.msra.mxu0 0.0
        %1591 = vmatprep.subr.mxu0 0.0
        %1592 = vmatpush1.msra.mxu0 0.0
        %1593 = vmatprep.subr.mxu0 0.0
        %1594 = vmatpush1.msra.mxu0 0.0
        %1595 = vmatprep.subr.mxu0 0.0
        %1596 = vmatpush1.msra.mxu0 0.0
        %1597 = vmatprep.subr.mxu0 0.0
        %1598 = vmatpush1.msra.mxu0 0.0
        %1599 = vmatprep.subr.mxu0 0.0
        %1600 = vmatpush1.msra.mxu0 0.0
        %1601 = vmatprep.subr.mxu0 0.0
        %1602 = vmatpush1.msra.mxu0 %v1039
        %1603 = vmatprep.subr.mxu0 0.0
        %1604 = vmatpush1.msra.mxu0 %v1038
        %1605 = vmatprep.subr.mxu0 0.0
        %1606 = vmatpush1.msra.mxu0 %v1037
        %1607 = vmatprep.subr.mxu0 0.0
        %1608 = vmatpush1.msra.mxu0 %v1036
        %1609 = vmatprep.subr.mxu0 0.0
        %1610 = vmatpush2.msra.mxu0 0.0
        %1611 = vmatprep.subr.mxu0 0.0
        %1612 = vmatpush2.msra.mxu0 0.0
        %1613 = vmatprep.subr.mxu0 0.0
        %1614 = vmatpush2.msra.mxu0 0.0
        %1615 = vmatprep.subr.mxu0 0.0
        %1616 = vmatpush2.msra.mxu0 0.0
        %1617 = vmatprep.subr.mxu0 0.0
        %1618 = vmatpush2.msra.mxu0 0.0
        %1619 = vmatprep.subr.mxu0 0.0
        %1620 = vmatpush2.msra.mxu0 0.0
        %1621 = vmatprep.subr.mxu0 0.0
        %1622 = vmatpush2.msra.mxu0 0.0
        %1623 = vmatprep.subr.mxu0 0.0
        %1624 = vmatpush2.msra.mxu0 0.0
        %1625 = vmatprep.subr.mxu0 0.0
        %1626 = vmatpush2.msra.mxu0 0.0
        %1627 = vmatprep.subr.mxu0 0.0
        %1628 = vmatpush2.msra.mxu0 0.0
        %1629 = vmatprep.subr.mxu0 0.0
        %1630 = vmatpush2.msra.mxu0 0.0
        %1631 = vmatprep.subr.mxu0 0.0
        %1632 = vmatpush2.msra.mxu0 0.0
        %1633 = vmatprep.subr.mxu0 0.0
        %1634 = vmatpush2.msra.mxu0 0.0
        %1635 = vmatprep.subr.mxu0 0.0
        %1636 = vmatpush2.msra.mxu0 0.0
        %1637 = vmatprep.subr.mxu0 0.0
        %1638 = vmatpush2.msra.mxu0 0.0
        %1639 = vmatprep.subr.mxu0 0.0
        %1640 = vmatpush2.msra.mxu0 0.0
        %1641 = vmatprep.mubr.f32.mxu0 0.0
        %1642 = vmatmul.mubr.f32.gmra.mxu0 %v1575
        %v1643 = vpop.f32.mrf.mxu0
        %v1644 = vadd.f32 %v1573, %v1643
        %v1645 = vpop.f32.mrf.mxu0
        %1646 = vdwg.mxu0
        %v1647 = vmul.f32 %v1644, %v1644
        %v1648 = vmul.f32 %v1644, %v1647
        %v1649 = vmul.f32 %v1648, 0.044715
        %v1650 = vadd.f32 %v1644, %v1649
        %v1651 = vmul.f32 %v1650, 0.7978846
        %v1652 = vtanh.pop %v1651
        %v1653 = vadd.f32 %v1652, 1.0
        %v1654 = vmul.f32 %v1653, 0.5
        %v1655 = vmul.f32 %v1644, %v1654
        %v1656 = vlaneseq
        %v1657 = vshrl.u32 %v1656, 7
        %v1658 = vsub.s32 0, %v1657
        %v1659 = vrot.slane %v1053, %v1658
        %v1661 = vsel %vm928, %v1655, 0
        %1663 = vmatprep.subr.mxu0 0.0
        %1664 = vmatpush1.msra.mxu0 0.0
        %1665 = vmatprep.subr.mxu0 0.0
        %1666 = vmatpush1.msra.mxu0 0.0
        %1667 = vmatprep.subr.mxu0 0.0
        %1668 = vmatpush1.msra.mxu0 0.0
        %1669 = vmatprep.subr.mxu0 0.0
        %1670 = vmatpush1.msra.mxu0 0.0
        %1671 = vmatprep.subr.mxu0 0.0
        %1672 = vmatpush1.msra.mxu0 0.0
        %1673 = vmatprep.subr.mxu0 0.0
        %1674 = vmatpush1.msra.mxu0 0.0
        %1675 = vmatprep.subr.mxu0 0.0
        %1676 = vmatpush1.msra.mxu0 0.0
        %1677 = vmatprep.subr.mxu0 0.0
        %1678 = vmatpush1.msra.mxu0 0.0
        %1679 = vmatprep.subr.mxu0 0.0
        %1680 = vmatpush1.msra.mxu0 %v1047
        %1681 = vmatprep.subr.mxu0 0.0
        %1682 = vmatpush1.msra.mxu0 %v1046
        %1683 = vmatprep.subr.mxu0 0.0
        %1684 = vmatpush1.msra.mxu0 %v1045
        %1685 = vmatprep.subr.mxu0 0.0
        %1686 = vmatpush1.msra.mxu0 %v1044
        %1687 = vmatprep.subr.mxu0 0.0
        %1688 = vmatpush1.msra.mxu0 %v1043
        %1689 = vmatprep.subr.mxu0 0.0
        %1690 = vmatpush1.msra.mxu0 %v1042
        %1691 = vmatprep.subr.mxu0 0.0
        %1692 = vmatpush1.msra.mxu0 %v1041
        %1693 = vmatprep.subr.mxu0 0.0
        %1694 = vmatpush1.msra.mxu0 %v1040
        %1695 = vmatprep.subr.mxu0 0.0
        %1696 = vmatpush2.msra.mxu0 0.0
        %1697 = vmatprep.subr.mxu0 0.0
        %1698 = vmatpush2.msra.mxu0 0.0
        %1699 = vmatprep.subr.mxu0 0.0
        %1700 = vmatpush2.msra.mxu0 0.0
        %1701 = vmatprep.subr.mxu0 0.0
        %1702 = vmatpush2.msra.mxu0 0.0
        %1703 = vmatprep.subr.mxu0 0.0
        %1704 = vmatpush2.msra.mxu0 0.0
        %1705 = vmatprep.subr.mxu0 0.0
        %1706 = vmatpush2.msra.mxu0 0.0
        %1707 = vmatprep.subr.mxu0 0.0
        %1708 = vmatpush2.msra.mxu0 0.0
        %1709 = vmatprep.subr.mxu0 0.0
        %1710 = vmatpush2.msra.mxu0 0.0
        %1711 = vmatprep.subr.mxu0 0.0
        %1712 = vmatpush2.msra.mxu0 0.0
        %1713 = vmatprep.subr.mxu0 0.0
        %1714 = vmatpush2.msra.mxu0 0.0
        %1715 = vmatprep.subr.mxu0 0.0
        %1716 = vmatpush2.msra.mxu0 0.0
        %1717 = vmatprep.subr.mxu0 0.0
        %1718 = vmatpush2.msra.mxu0 0.0
        %1719 = vmatprep.subr.mxu0 0.0
        %1720 = vmatpush2.msra.mxu0 0.0
        %1721 = vmatprep.subr.mxu0 0.0
        %1722 = vmatpush2.msra.mxu0 0.0
        %1723 = vmatprep.subr.mxu0 0.0
        %1724 = vmatpush2.msra.mxu0 0.0
        %1725 = vmatprep.subr.mxu0 0.0
        %1726 = vmatpush2.msra.mxu0 0.0
        %1727 = vmatprep.mubr.f32.mxu0 0.0
        %1728 = vmatmul.mubr.f32.gmra.mxu0 %v1661
        %v1729 = vpop.f32.mrf.mxu0
        %v1730 = vadd.f32 %v1659, %v1729
        %v1731 = vpop.f32.mrf.mxu0
        %1732 = vdwg.mxu0
        %v1733 = vadd.f32 %v1569, %v1730
        %v1734 = vsel %vm259, %v1733, 0.0
        %1735 = vadd.xlane.f32.xlu0 %v1734
        %v1736 = vpop.xlane.xlu0 %1735
        %v1737 = vmul.f32 %v1736, %v263
        %v1738 = vsub.f32 %v1733, %v1737
        %v1739 = vmul.f32 %v1738, %v1738
        %v1740 = vsel %vm259, %v1739, 0.0
        %1741 = vadd.xlane.f32.xlu0 %v1740
        %v1742 = vpop.xlane.xlu0 %1741
        %v1743 = vmul.f32 %v1742, %v263
        %v1744 = vadd.f32 %v1743, 1e-12
        %v1745 = vrsqrt.pop %v1744
        %v1746 = vmul.f32 %v1738, %v1745
        %v1747 = vlaneseq
        %v1748 = vshrl.u32 %v1747, 7
        %v1749 = vsub.s32 0, %v1748
        %v1750 = vrot.slane %v1054, %v1749
        %v1751 = vmul.f32 %v1746, %v1750
        %v1752 = vlaneseq
        %v1753 = vshrl.u32 %v1752, 7
        %v1754 = vsub.s32 0, %v1753
        %v1755 = vrot.slane %v1055, %v1754
        %v1756 = vadd.f32 %v1751, %v1755
        %s1757 = scalar_lea.vmem %s238, 16 [#allocation4]
        %1758 = vst.msk [vmem:[%s1757] sm:$0xff] %vm259, %v1756
        %v1759 = vld [vmem:[#allocation2 + $0x150] sm:$0xff]
        %v1760 = vld [vmem:[#allocation2 + $0x158] sm:$0xff]
        %v1761 = vld [vmem:[#allocation2 + $0x160] sm:$0xff]
        %v1762 = vld [vmem:[#allocation2 + $0x168] sm:$0xff]
        %v1763 = vld [vmem:[#allocation2 + $0x170] sm:$0xff]
        %v1764 = vld [vmem:[#allocation2 + $0x178] sm:$0xff]
        %v1765 = vld [vmem:[#allocation2 + $0x180] sm:$0xff]
        %v1766 = vld [vmem:[#allocation2 + $0x188] sm:$0xff]
        %v1767 = vld [vmem:[#allocation2 + $0x190] sm:$0x1]
        %v1768 = vld [vmem:[#allocation2 + $0x191] sm:$0x1]
        %v1770 = vsel %vm259, %v1756, 0
        %1772 = vmatprep.subr.mxu0 0.0
        %1773 = vmatpush1.msra.mxu0 0.0
        %1774 = vmatprep.subr.mxu0 0.0
        %1775 = vmatpush1.msra.mxu0 0.0
        %1776 = vmatprep.subr.mxu0 0.0
        %1777 = vmatpush1.msra.mxu0 0.0
        %1778 = vmatprep.subr.mxu0 0.0
        %1779 = vmatpush1.msra.mxu0 0.0
        %1780 = vmatprep.subr.mxu0 0.0
        %1781 = vmatpush1.msra.mxu0 0.0
        %1782 = vmatprep.subr.mxu0 0.0
        %1783 = vmatpush1.msra.mxu0 0.0
        %1784 = vmatprep.subr.mxu0 0.0
        %1785 = vmatpush1.msra.mxu0 0.0
        %1786 = vmatprep.subr.mxu0 0.0
        %1787 = vmatpush1.msra.mxu0 0.0
        %1788 = vmatprep.subr.mxu0 0.0
        %1789 = vmatpush1.msra.mxu0 0.0
        %1790 = vmatprep.subr.mxu0 0.0
        %1791 = vmatpush1.msra.mxu0 0.0
        %1792 = vmatprep.subr.mxu0 0.0
        %1793 = vmatpush1.msra.mxu0 0.0
        %1794 = vmatprep.subr.mxu0 0.0
        %1795 = vmatpush1.msra.mxu0 0.0
        %1796 = vmatprep.subr.mxu0 0.0
        %1797 = vmatpush1.msra.mxu0 %v1762
        %1798 = vmatprep.subr.mxu0 0.0
        %1799 = vmatpush1.msra.mxu0 %v1761
        %1800 = vmatprep.subr.mxu0 0.0
        %1801 = vmatpush1.msra.mxu0 %v1760
        %1802 = vmatprep.subr.mxu0 0.0
        %1803 = vmatpush1.msra.mxu0 %v1759
        %1804 = vmatprep.subr.mxu0 0.0
        %1805 = vmatpush2.msra.mxu0 0.0
        %1806 = vmatprep.subr.mxu0 0.0
        %1807 = vmatpush2.msra.mxu0 0.0
        %1808 = vmatprep.subr.mxu0 0.0
        %1809 = vmatpush2.msra.mxu0 0.0
        %1810 = vmatprep.subr.mxu0 0.0
        %1811 = vmatpush2.msra.mxu0 0.0
        %1812 = vmatprep.subr.mxu0 0.0
        %1813 = vmatpush2.msra.mxu0 0.0
        %1814 = vmatprep.subr.mxu0 0.0
        %1815 = vmatpush2.msra.mxu0 0.0
        %1816 = vmatprep.subr.mxu0 0.0
        %1817 = vmatpush2.msra.mxu0 0.0
        %1818 = vmatprep.subr.mxu0 0.0
        %1819 = vmatpush2.msra.mxu0 0.0
        %1820 = vmatprep.subr.mxu0 0.0
        %1821 = vmatpush2.msra.mxu0 0.0
        %1822 = vmatprep.subr.mxu0 0.0
        %1823 = vmatpush2.msra.mxu0 0.0
        %1824 = vmatprep.subr.mxu0 0.0
        %1825 = vmatpush2.msra.mxu0 0.0
        %1826 = vmatprep.subr.mxu0 0.0
        %1827 = vmatpush2.msra.mxu0 0.0
        %1828 = vmatprep.subr.mxu0 0.0
        %1829 = vmatpush2.msra.mxu0 0.0
        %1830 = vmatprep.subr.mxu0 0.0
        %1831 = vmatpush2.msra.mxu0 0.0
        %1832 = vmatprep.subr.mxu0 0.0
        %1833 = vmatpush2.msra.mxu0 0.0
        %1834 = vmatprep.subr.mxu0 0.0
        %1835 = vmatpush2.msra.mxu0 0.0
        %1836 = vmatprep.mubr.f32.mxu0 0.0
        %1837 = vmatmul.mubr.f32.gmra.mxu0 %v1770
        %v1838 = vpop.f32.mrf.mxu0
        %v1839 = vadd.f32 %v1767, %v1838
        %v1840 = vpop.f32.mrf.mxu0
        %1841 = vdwg.mxu0
        %v1842 = vtanh.pop %v1839
        %v1844 = vsel %vm259, %v1842, 0
        %1846 = vmatprep.subr.mxu0 0.0
        %1847 = vmatpush1.msra.mxu0 0.0
        %1848 = vmatprep.subr.mxu0 0.0
        %1849 = vmatpush1.msra.mxu0 0.0
        %1850 = vmatprep.subr.mxu0 0.0
        %1851 = vmatpush1.msra.mxu0 0.0
        %1852 = vmatprep.subr.mxu0 0.0
        %1853 = vmatpush1.msra.mxu0 0.0
        %1854 = vmatprep.subr.mxu0 0.0
        %1855 = vmatpush1.msra.mxu0 0.0
        %1856 = vmatprep.subr.mxu0 0.0
        %1857 = vmatpush1.msra.mxu0 0.0
        %1858 = vmatprep.subr.mxu0 0.0
        %1859 = vmatpush1.msra.mxu0 0.0
        %1860 = vmatprep.subr.mxu0 0.0
        %1861 = vmatpush1.msra.mxu0 0.0
        %1862 = vmatprep.subr.mxu0 0.0
        %1863 = vmatpush1.msra.mxu0 0.0
        %1864 = vmatprep.subr.mxu0 0.0
        %1865 = vmatpush1.msra.mxu0 0.0
        %1866 = vmatprep.subr.mxu0 0.0
        %1867 = vmatpush1.msra.mxu0 0.0
        %1868 = vmatprep.subr.mxu0 0.0
        %1869 = vmatpush1.msra.mxu0 0.0
        %1870 = vmatprep.subr.mxu0 0.0
        %1871 = vmatpush1.msra.mxu0 %v1766
        %1872 = vmatprep.subr.mxu0 0.0
        %1873 = vmatpush1.msra.mxu0 %v1765
        %1874 = vmatprep.subr.mxu0 0.0
        %1875 = vmatpush1.msra.mxu0 %v1764
        %1876 = vmatprep.subr.mxu0 0.0
        %1877 = vmatpush1.msra.mxu0 %v1763
        %1878 = vmatprep.subr.mxu0 0.0
        %1879 = vmatpush2.msra.mxu0 0.0
        %1880 = vmatprep.subr.mxu0 0.0
        %1881 = vmatpush2.msra.mxu0 0.0
        %1882 = vmatprep.subr.mxu0 0.0
        %1883 = vmatpush2.msra.mxu0 0.0
        %1884 = vmatprep.subr.mxu0 0.0
        %1885 = vmatpush2.msra.mxu0 0.0
        %1886 = vmatprep.subr.mxu0 0.0
        %1887 = vmatpush2.msra.mxu0 0.0
        %1888 = vmatprep.subr.mxu0 0.0
        %1889 = vmatpush2.msra.mxu0 0.0
        %1890 = vmatprep.subr.mxu0 0.0
        %1891 = vmatpush2.msra.mxu0 0.0
        %1892 = vmatprep.subr.mxu0 0.0
        %1893 = vmatpush2.msra.mxu0 0.0
        %1894 = vmatprep.subr.mxu0 0.0
        %1895 = vmatpush2.msra.mxu0 0.0
        %1896 = vmatprep.subr.mxu0 0.0
        %1897 = vmatpush2.msra.mxu0 0.0
        %1898 = vmatprep.subr.mxu0 0.0
        %1899 = vmatpush2.msra.mxu0 0.0
        %1900 = vmatprep.subr.mxu0 0.0
        %1901 = vmatpush2.msra.mxu0 0.0
        %1902 = vmatprep.subr.mxu0 0.0
        %1903 = vmatpush2.msra.mxu0 0.0
        %1904 = vmatprep.subr.mxu0 0.0
        %1905 = vmatpush2.msra.mxu0 0.0
        %1906 = vmatprep.subr.mxu0 0.0
        %1907 = vmatpush2.msra.mxu0 0.0
        %1908 = vmatprep.subr.mxu0 0.0
        %1909 = vmatpush2.msra.mxu0 0.0
        %1910 = vmatprep.mubr.f32.mxu0 0.0
        %1911 = vmatmul.mubr.f32.gmra.mxu0 %v1844
        %v1912 = vpop.f32.mrf.mxu0
        %v1913 = vadd.f32 %v1768, %v1912
        %v1914 = vpop.f32.mrf.mxu0
        %1915 = vdwg.mxu0
        %1916 = vst [vmem:[%s253] sm:$0x1] %v1913
        %s1917 = sand.u32 %s120, 1
        %s1918 = sand.u32 %s120, 1
        %s1919 = smul.addr %s1918, 24
        %s1920 = scalar_lea.vmem [#allocation4], %s1919
        %p1921 = scmp.lt.s32.totalorder %s18, 1
        %s1922 = scalar_select %p1921, %s18, 1
        %s1923 = scalar_lea.vmem %s5, %s1922
        // Predicated region
        $region41: #{custom_bert_forward.1} parent=35 // pred_check
          %p1924 = pneg %p130
        $region42: #{custom_bert_forward.1} parent=35 // pred_check_branch
          %1926 = sbr.rel (%p1924) target = $region44
        $region43: #{custom_bert_forward.1} parent=35 // pred_region
          %s1927 = smul.addr %s18, 8
          %s1928 = scalar_lea.vmem %s4, %s1927
          // Predicated region
          $region45: #{custom_bert_forward.1} parent=43 // pred_check
            _
          $region46: #{custom_bert_forward.1} parent=43 // pred_check_branch
            %1930 = sbr.rel (0) target = $region48
          $region47: #{custom_bert_forward.1} parent=43 // pred_region
            // Predicated region
            $region49: #{custom_bert_forward.1} parent=47 // pred_check
              _
            $region50: #{custom_bert_forward.1} parent=47 // pred_check_branch
              %1932 = sbr.rel (0) target = $region52
            $region51: #{custom_bert_forward.1} parent=47 // pred_region
              // Predicated region
              $region64: #{custom_bert_forward.1} parent=51 // pred_check
                _
              $region65: #{custom_bert_forward.1} parent=51 // pred_check_branch
                %1952 = sbr.rel (0) target = $region67
              $region66: #{custom_bert_forward.1} parent=51 // pred_region
                loop: start=0, step=1, limit=1
                $region68: #{custom_bert_forward.1} parent=66 // loop_pre_header
                  _
                $region69: #{custom_bert_forward.1} parent=66 // loop_header
                  %s1954 = sphi 0, %s1958
                  %p1955 = scmp.ge.s32.totalorder %s1954, 1
                  %s1959 = sphi %s1920, %s1920
                  %s1960 = sphi %s1928, %s1928
                $region70: #{custom_bert_forward.1} parent=66 // loop_header_branch
                  %1957 = sbr.rel (%p1955) target = $region74
                $region71: #{custom_bert_forward.1} parent=66 // loop_body
                  %v1961 = vld [vmem:[%s1959] sm:$0xff]
                  %1962 = vst [vmem:[%s1960] sm:$0xff] %v1961
                  %v1963 = vld [vmem:[%s1959 + $0x8] sm:$0xff]
                  %1964 = vst [vmem:[%s1960 + $0x10] sm:$0xff] %v1963
                  %v1965 = vld [vmem:[%s1959 + $0x10] sm:$0xff]
                  %1966 = vst [vmem:[%s1960 + $0x20] sm:$0xff] %v1965
                $region72: #{custom_bert_forward.1} parent=66 // loop_footer
                  %s1958 = sadd.s32 1, %s1954
                $region73: #{custom_bert_forward.1} parent=66 // loop_footer_branch
                  %1953 = sbr.rel target = $region69
                $region74: #{custom_bert_forward.1} parent=66 // loop_exit
                  _
              $region67: #{custom_bert_forward.1} parent=51 // pred_fallthru
                _
              // Predicated region
              $region75: #{custom_bert_forward.1} parent=51 // pred_check
                _
              $region76: #{custom_bert_forward.1} parent=51 // pred_check_branch
                %1968 = sbr.rel target = $region78
              $region77: #{custom_bert_forward.1} parent=51 // pred_region
                _
              $region78: #{custom_bert_forward.1} parent=51 // pred_fallthru
                _
            $region52: #{custom_bert_forward.1} parent=47 // pred_fallthru
              _
            // Predicated region
            $region53: #{custom_bert_forward.1} parent=47 // pred_check
              _
            $region54: #{custom_bert_forward.1} parent=47 // pred_check_branch
              %1934 = sbr.rel target = $region56
            $region55: #{custom_bert_forward.1} parent=47 // pred_region
              %s1936 = ssub.s32 256, 1
              loop: start=0, step=1, limit=1
              $region57: #{custom_bert_forward.1} parent=55 // loop_pre_header
                _
              $region58: #{custom_bert_forward.1} parent=55 // loop_header
                %s1938 = sphi 0, %s1942
                %p1939 = scmp.ge.s32.totalorder %s1938, 1
                %s1943 = sphi %s1920, %s1920
                %s1944 = sphi %s1928, %s1928
              $region59: #{custom_bert_forward.1} parent=55 // loop_header_branch
                %1941 = sbr.rel (%p1939) target = $region63
              $region60: #{custom_bert_forward.1} parent=55 // loop_body
                %v1945 = vld [vmem:[%s1943] sm:%s1936]
                %1946 = vst [vmem:[%s1944] sm:%s1936] %v1945
                %v1947 = vld [vmem:[%s1943 + $0x8] sm:%s1936]
                %1948 = vst [vmem:[%s1944 + $0x10] sm:%s1936] %v1947
                %v1949 = vld [vmem:[%s1943 + $0x10] sm:%s1936]
                %1950 = vst [vmem:[%s1944 + $0x20] sm:%s1936] %v1949
              $region61: #{custom_bert_forward.1} parent=55 // loop_footer
                %s1942 = sadd.s32 1, %s1938
              $region62: #{custom_bert_forward.1} parent=55 // loop_footer_branch
                %1937 = sbr.rel target = $region58
              $region63: #{custom_bert_forward.1} parent=55 // loop_exit
                _
            $region56: #{custom_bert_forward.1} parent=47 // pred_fallthru
              _
          $region48: #{custom_bert_forward.1} parent=43 // pred_fallthru
            _
          %1969 = vnop
        $region44: #{custom_bert_forward.1} parent=35 // pred_fallthru
          _
        // Predicated region
        $region79: #{custom_bert_forward.1} parent=35 // pred_check
          %p1970 = pneg %p156
        $region80: #{custom_bert_forward.1} parent=35 // pred_check_branch
          %1972 = sbr.rel (%p1970) target = $region82
        $region81: #{custom_bert_forward.1} parent=35 // pred_region
          _
        $region82: #{custom_bert_forward.1} parent=35 // pred_fallthru
          _
      $region36: #{custom_bert_forward.1} parent=5 // pred_fallthru
        _
      %p1973 = scmp.le.s32.totalorder 2, %s13
      // Predicated region
      $region83: #{custom_bert_forward.1} parent=5 // pred_check
        %p1974 = pneg %p1973
      $region84: #{custom_bert_forward.1} parent=5 // pred_check_branch
        %1976 = sbr.rel (%p1974) target = $region86
      $region85: #{custom_bert_forward.1} parent=5 // pred_region
        %s1977 = ssub.s32 %s13, 2
        // Predicated region
        $region87: #{custom_bert_forward.1} parent=85 // pred_check
          %p1978 = pneg %p136
        $region88: #{custom_bert_forward.1} parent=85 // pred_check_branch
          %1980 = sbr.rel (%p1978) target = $region90
        $region89: #{custom_bert_forward.1} parent=85 // pred_region
          %s1981 = sand.u32 %s121, 1
          %s1982 = sand.u32 %s121, 1
          %s1983 = smul.addr %s1982, 24
          %s1984 = scalar_lea.vmem [#allocation4], %s1983
        $region90: #{custom_bert_forward.1} parent=85 // pred_fallthru
          _
        // Predicated region
        $region91: #{custom_bert_forward.1} parent=85 // pred_check
          %p1985 = pneg %p162
        $region92: #{custom_bert_forward.1} parent=85 // pred_check_branch
          %1987 = sbr.rel (%p1985) target = $region94
        $region93: #{custom_bert_forward.1} parent=85 // pred_region
          %p1988 = scmp.lt.s32.totalorder %s19, 1
          %s1989 = scalar_select %p1988, %s19, 1
          %s1990 = scalar_lea.vmem %s5, %s1989
        $region94: #{custom_bert_forward.1} parent=85 // pred_fallthru
          _
      $region86: #{custom_bert_forward.1} parent=5 // pred_fallthru
        _
    $region6: #{custom_bert_forward.1} parent=1 // loop_footer
      %s17 = sadd.s32 1, %s13
    $region7: #{custom_bert_forward.1} parent=1 // loop_footer_branch
      %12 = sbr.rel target = $region3
    $region8: #{custom_bert_forward.1} parent=1 // loop_exit
      _
    %1991 = vsyncpa [#allocation3], 1
    %s1992 = scalar_lea.sflag [#allocation3], 1
    %1993 = vsyncpa %s1992, 1

</llo_original>
